<compile_context>
chip_gen: v6e
topology: v6e:2x2x1
jax: 0.10.0
libtpu: 0.0.40
codegen_flags: <defaults>
</compile_context>

<pallas_src>
import functools

import jax
import jax.numpy as jnp
from jax.experimental import pallas as pl
from jax.experimental.pallas import tpu as pltpu

MXU_DTYPE = jnp.bfloat16          # native MXU input dtype on v5e/v6e/v7x
LN_EPS = 1e-5
VMEM_LIMIT = 48 * 1024 * 1024     # > 16/32 MiB scoped defaults, < v7x 64 MiB physical


# --------------------------------------------------------------------------
# helpers
# --------------------------------------------------------------------------
def _gelu_tanh(x):
    c = 0.7978845608028654  # sqrt(2/pi)
    return 0.5 * x * (1.0 + jnp.tanh(c * (x + 0.044715 * x * x * x)))


def _row_tile(m):
    # 512-row tiles reach ~85% of the HBM roofline and keep the ViT-B MLP
    # working set within the raised VMEM limit on every generation.
    # TODO(synk): bump to 1024 on v6e/v5e for the dim->dim projections.
    return m if m <= 512 else 512


# --------------------------------------------------------------------------
# Kernel 1: fused [LayerNorm] -> matmul -> [bias] -> [GELU] -> [scale] -> [residual]
# --------------------------------------------------------------------------
def _fused_linear_kernel(*refs, has_ln, has_bias, has_scale, has_residual,
                         activation):
    refs = list(refs)
    x_ref = refs.pop(0)
    if has_ln:
        g_ref = refs.pop(0)
        beta_ref = refs.pop(0)
    w_ref = refs.pop(0)
    if has_bias:
        bias_ref = refs.pop(0)
    if has_scale:
        scale_ref = refs.pop(0)
    if has_residual:
        res_ref = refs.pop(0)
    o_ref = refs.pop(0)

    x = x_ref[...].astype(jnp.float32)                       # (tm, K)
    if has_ln:                                               # LN prologue (f32)
        mean = jnp.mean(x, axis=-1, keepdims=True)
        var = jnp.mean(jnp.square(x - mean), axis=-1, keepdims=True)
        x = (x - mean) * jax.lax.rsqrt(var + LN_EPS) * g_ref[...] + beta_ref[...]

    acc = jnp.dot(x.astype(w_ref.dtype), w_ref[...],         # bf16 MXU, f32 acc
                  preferred_element_type=jnp.float32)
    if has_bias:
        acc = acc + bias_ref[...]
    if activation == "gelu":
        acc = _gelu_tanh(acc)
    if has_scale:
        acc = acc * scale_ref[...]                           # channel_selection
    if has_residual:
        acc = acc + res_ref[...].astype(jnp.float32)
    o_ref[...] = acc.astype(o_ref.dtype)


def fused_linear(x, w, *, ln=None, bias=None, scale=None, residual=None,
                 activation=None):
    """y = [gelu]( LN(x) @ w + b ) * scale (+ residual), row-tiled over (B*N, K)."""
    B, N, K = x.shape
    M = B * N
    N_out = w.shape[1]
    x2 = x.reshape(M, K)
    tm = _row_tile(M)

    def _const_spec(n_cols):
        return pl.BlockSpec((1, n_cols), lambda i: (0, 0))   # resident, no re-DMA

    args = [x2]
    in_specs = [pl.BlockSpec((tm, K), lambda i: (i, 0))]

    has_ln = ln is not None
    if has_ln:
        g, b_ = ln
        args += [g.astype(jnp.float32).reshape(1, K),
                 b_.astype(jnp.float32).reshape(1, K)]
        in_specs += [_const_spec(K), _const_spec(K)]

    args.append(w.astype(MXU_DTYPE))                         # weight cast once
    in_specs.append(pl.BlockSpec((K, N_out), lambda i: (0, 0)))

    has_bias = bias is not None
    if has_bias:
        args.append(bias.astype(jnp.float32).reshape(1, N_out))
        in_specs.append(_const_spec(N_out))

    has_scale = scale is not None
    if has_scale:
        args.append(scale.astype(jnp.float32).reshape(1, N_out))
        in_specs.append(_const_spec(N_out))

    has_residual = residual is not None
    if has_residual:
        args.append(residual.reshape(M, N_out))
        in_specs.append(pl.BlockSpec((tm, N_out), lambda i: (i, 0)))

    out = pl.pallas_call(
        functools.partial(_fused_linear_kernel, has_ln=has_ln, has_bias=has_bias,
                          has_scale=has_scale, has_residual=has_residual,
                          activation=activation),
        out_shape=jax.ShapeDtypeStruct((M, N_out), x.dtype),
        grid_spec=pltpu.PrefetchScalarGridSpec(
            num_scalar_prefetch=0,
            grid=(pl.cdiv(M, tm),),
            in_specs=in_specs,
            out_specs=pl.BlockSpec((tm, N_out), lambda i: (i, 0)),
        ),
        compiler_params=pltpu.CompilerParams(
            dimension_semantics=("parallel",),
            vmem_limit_bytes=VMEM_LIMIT,
        ),
    )(*args)
    return out.reshape(B, N, N_out)


# --------------------------------------------------------------------------
# Kernel 2: per-batch attention (all heads) fused with to_out + bias + residual
# --------------------------------------------------------------------------
def _attn_out_kernel(qkv_ref, res_ref, wo_ref, bo_ref, o_ref, *, heads, dim):
    dh = dim // heads
    # start the accumulator with bias + residual (f32, lane-dense (N, dim))
    acc = bo_ref[...] + res_ref[...].astype(jnp.float32)
    for h in range(heads):
        # q already carries select1 * dim**-0.5 (folded into the QKV epilogue)
        q = qkv_ref[:, h * dh:(h + 1) * dh].astype(MXU_DTYPE)
        k = qkv_ref[:, dim + h * dh:dim + (h + 1) * dh].astype(MXU_DTYPE)
        v = qkv_ref[:, 2 * dim + h * dh:2 * dim + (h + 1) * dh].astype(MXU_DTYPE)
        s = jax.lax.dot_general(q, k, (((1,), (1,)), ((), ())),     # q @ k^T
                                preferred_element_type=jnp.float32)
        s = s - jnp.max(s, axis=-1, keepdims=True)
        p = jnp.exp(s)
        p = p * pl.reciprocal(jnp.sum(p, axis=-1, keepdims=True), approx=True)
        o_h = jnp.dot(p.astype(MXU_DTYPE), v,                        # (N, dh)
                      preferred_element_type=jnp.float32)
        # per-head partial of the to_out projection: o_h @ wo[h*dh:(h+1)*dh, :]
        acc = acc + jnp.dot(o_h.astype(MXU_DTYPE),
                            wo_ref[h * dh:(h + 1) * dh, :],
                            preferred_element_type=jnp.float32)
    o_ref[...] = acc.astype(o_ref.dtype)


def attention_block(qkv, x_res, wo, bo, heads):
    B, N, dim3 = qkv.shape
    dim = dim3 // 3
    out = pl.pallas_call(
        functools.partial(_attn_out_kernel, heads=heads, dim=dim),
        out_shape=jax.ShapeDtypeStruct((B, N, dim), x_res.dtype),
        grid_spec=pltpu.PrefetchScalarGridSpec(
            num_scalar_prefetch=0,
            grid=(B,),
            in_specs=[
                pl.BlockSpec((None, N, dim3), lambda b: (b, 0, 0)),
                pl.BlockSpec((None, N, dim), lambda b: (b, 0, 0)),
                pl.BlockSpec((dim, dim), lambda b: (0, 0)),    # wo resident
                pl.BlockSpec((1, dim), lambda b: (0, 0)),      # bias resident
            ],
            out_specs=pl.BlockSpec((None, N, dim), lambda b: (b, 0, 0)),
        ),
        compiler_params=pltpu.CompilerParams(
            dimension_semantics=("parallel",),
            vmem_limit_bytes=VMEM_LIMIT,
        ),
    )(qkv, x_res, wo.astype(MXU_DTYPE), bo.astype(jnp.float32).reshape(1, dim))
    return out


# --------------------------------------------------------------------------
# Transformer forward (Residual(PreNorm(Attention)) -> Residual(PreNorm(FF)))
# --------------------------------------------------------------------------
def transformer_forward(x, layers, heads, mask=None):
    if mask is not None:
        raise NotImplementedError("attention mask path not implemented")  # TODO(synk)
    dim = x.shape[-1]
    att_scale = dim ** (-0.5)                    # spec: scale = dim ** -0.5
    for p in layers:
        # --- attention block: LN1 + QKV (+select1, q pre-scaled) in ONE kernel ---
        wqkv = jnp.concatenate([p["wq"], p["wk"], p["wv"]], axis=1)      # (D, 3D)
        sel = p["select1"]
        qkv_scale = jnp.concatenate([sel * att_scale, sel, sel])         # (3D,)
        qkv = fused_linear(x, wqkv, ln=(p["ln1_g"], p["ln1_b"]), scale=qkv_scale)
        # per-batch attention + to_out + bias + residual
        x = attention_block(qkv, x, p["wo"], p["bo"], heads)
        # --- feed-forward block ---
        h = fused_linear(x, p["w1"], ln=(p["ln2_g"], p["ln2_b"]),
                         bias=p["b1"], scale=p["select2"], activation="gelu")
        x = fused_linear(h, p["w2"], bias=p["b2"], residual=x)
    return x


# --------------------------------------------------------------------------
# Pure-JAX reference (mirrors the torch module; matmul inputs in bf16 to match
# the kernels' MXU numerics, everything else f32)
# --------------------------------------------------------------------------
def _ln_ref(x, g, b, eps=LN_EPS):
    mean = jnp.mean(x, axis=-1, keepdims=True)
    var = jnp.mean(jnp.square(x - mean), axis=-1, keepdims=True)
    return (x - mean) * jax.lax.rsqrt(var + eps) * g + b


def reference_forward(x, layers, heads):
    dim = x.shape[-1]
    att_scale = dim ** (-0.5)
    f32 = jnp.float32

    def mm(eq, a, b):
        return jnp.einsum(eq, a.astype(MXU_DTYPE), b.astype(MXU_DTYPE),
                          preferred_element_type=f32)

    for p in layers:
        h = _ln_ref(x, p["ln1_g"], p["ln1_b"])
        q = mm("bnk,kd->bnd", h, p["wq"]) * p["select1"]
        k = mm("bnk,kd->bnd", h, p["wk"]) * p["select1"]
        v = mm("bnk,kd->bnd", h, p["wv"]) * p["select1"]
        B, N, D = q.shape
        dh = D // heads
        qh = q.reshape(B, N, heads, dh).transpose(0, 2, 1, 3)
        kh = k.reshape(B, N, heads, dh).transpose(0, 2, 1, 3)
        vh = v.reshape(B, N, heads, dh).transpose(0, 2, 1, 3)
        dots = mm("bhid,bhjd->bhij", qh, kh) * att_scale
        attn = jax.nn.softmax(dots, axis=-1)
        o = mm("bhij,bhjd->bhid", attn, vh)
        o = o.transpose(0, 2, 1, 3).reshape(B, N, D)
        x = mm("bnk,kd->bnd", o, p["wo"]) + p["bo"] + x
        h = _ln_ref(x, p["ln2_g"], p["ln2_b"])
        h = _gelu_tanh(mm("bnk,kh->bnh", h, p["w1"]) + p["b1"]) * p["select2"]
        x = mm("bnh,hd->bnd", h, p["w2"]) + p["b2"] + x
    return x


# --------------------------------------------------------------------------
# test harness
# --------------------------------------------------------------------------
if __name__ == "__main__":
    key = jax.random.PRNGKey(0)

    # Small shapes implied by the forward: (B, num_patches + 1, dim).
    # NOTE: the torch module applies channel_selection(dim) to the MLP hidden
    # activation, which only broadcasts when mlp_dim == dim.
    B, N, dim, heads, mlp_dim, depth = 2, 8, 64, 4, 64, 2

    keys = jax.random.split(key, 1 + depth)
    x = jax.random.normal(keys[0], (B, N, dim), dtype=jnp.float32)

    layers = []
    for li in range(depth):
        ks = jax.random.split(keys[1 + li], 13)
        w_scale = dim ** (-0.5)
        # channel_selection params: init to ones, a few entries "pruned".
        sel1 = jnp.ones((dim,), jnp.float32).at[1].set(0.0).at[7].set(0.0).at[17].set(0.5)
        sel2 = jnp.ones((mlp_dim,), jnp.float32).at[3].set(0.0).at[11].set(0.25)
        layers.append(dict(
            ln1_g=1.0 + 0.1 * jax.random.normal(ks[0], (dim,), jnp.float32),
            ln1_b=0.1 * jax.random.normal(ks[1], (dim,), jnp.float32),
            wq=w_scale * jax.random.normal(ks[2], (dim, dim), jnp.float32),
            wk=w_scale * jax.random.normal(ks[3], (dim, dim), jnp.float32),
            wv=w_scale * jax.random.normal(ks[4], (dim, dim), jnp.float32),
            select1=sel1,
            wo=w_scale * jax.random.normal(ks[5], (dim, dim), jnp.float32),
            bo=0.1 * jax.random.normal(ks[6], (dim,), jnp.float32),
            ln2_g=1.0 + 0.1 * jax.random.normal(ks[7], (dim,), jnp.float32),
            ln2_b=0.1 * jax.random.normal(ks[8], (dim,), jnp.float32),
            w1=w_scale * jax.random.normal(ks[9], (dim, mlp_dim), jnp.float32),
            b1=0.1 * jax.random.normal(ks[10], (mlp_dim,), jnp.float32),
            select2=sel2,
            w2=(mlp_dim ** (-0.5)) * jax.random.normal(ks[11], (mlp_dim, dim), jnp.float32),
            b2=0.1 * jax.random.normal(ks[12], (dim,), jnp.float32),
        ))

    fwd = jax.jit(transformer_forward, static_argnames=("heads",))
    out = jax.block_until_ready(fwd(x, layers, heads=heads))

    ref = reference_forward(x, layers, heads)
    assert out.shape == (B, N, dim)
    err = float(jnp.max(jnp.abs(out - ref)))
    # bf16 MXU inputs + approximate reciprocal in the softmax denominator =>
    # relaxed tolerance vs. the reference (which mirrors the bf16 matmul inputs).
    assert jnp.allclose(out, ref, atol=3e-2, rtol=3e-2), f"max abs err = {err}"

    print("KERNEL_OK")
</pallas_src>

<mosaic_0001>
module attributes {stable_mosaic.version = 11 : i64} {
  func.func @_fused_linear_kernel(%arg0: i32, %arg1: memref<16x64xf32, #tpu.memory_space<vmem>>, %arg2: memref<1x64xf32, #tpu.memory_space<vmem>>, %arg3: memref<1x64xf32, #tpu.memory_space<vmem>>, %arg4: memref<64x192xbf16, #tpu.memory_space<vmem>>, %arg5: memref<1x192xf32, #tpu.memory_space<vmem>>, %arg6: memref<16x192xf32, #tpu.memory_space<vmem>>) attributes {dimension_semantics = [#tpu.dimension_semantics<parallel>], iteration_bounds = array<i64: 1>, scalar_prefetch = 0 : i64, scratch_operands = 0 : i64, tpu.core_type = #tpu.core_type<tc>, window_params = [{transform_indices = @transform_0, window_bounds = array<i64: 16, 64>}, {pipeline_mode = #tpu.pipeline_mode<synchronous>, transform_indices = @transform_1, window_bounds = array<i64: 1, 64>}, {pipeline_mode = #tpu.pipeline_mode<synchronous>, transform_indices = @transform_2, window_bounds = array<i64: 1, 64>}, {pipeline_mode = #tpu.pipeline_mode<synchronous>, transform_indices = @transform_3, window_bounds = array<i64: 64, 192>}, {pipeline_mode = #tpu.pipeline_mode<synchronous>, transform_indices = @transform_4, window_bounds = array<i64: 1, 192>}, {transform_indices = @transform_5, window_bounds = array<i64: 16, 192>}]} {
    %c0 = arith.constant 0 : index
    %c0_0 = arith.constant 0 : index
    %0 = vector.load %arg1[%c0, %c0_0] : memref<16x64xf32, #tpu.memory_space<vmem>>, vector<16x64xf32>
    %cst = arith.constant dense<0.000000e+00> : vector<16xf32>
    %1 = vector.multi_reduction <add>, %0, %cst [1] : vector<16x64xf32> to vector<16xf32>
    %2 = vector.shape_cast %1 : vector<16xf32> to vector<16x1xf32>
    %cst_1 = arith.constant 6.400000e+01 : f32
    %3 = vector.broadcast %cst_1 : f32 to vector<16x1xf32>
    %4 = arith.divf %2, %3 : vector<16x1xf32>
    %5 = vector.broadcast %4 : vector<16x1xf32> to vector<16x64xf32>
    %6 = arith.subf %0, %5 : vector<16x64xf32>
    %7 = arith.mulf %6, %6 : vector<16x64xf32>
    %cst_2 = arith.constant dense<0.000000e+00> : vector<16xf32>
    %8 = vector.multi_reduction <add>, %7, %cst_2 [1] : vector<16x64xf32> to vector<16xf32>
    %9 = vector.shape_cast %8 : vector<16xf32> to vector<16x1xf32>
    %cst_3 = arith.constant 6.400000e+01 : f32
    %10 = vector.broadcast %cst_3 : f32 to vector<16x1xf32>
    %11 = arith.divf %9, %10 : vector<16x1xf32>
    %12 = vector.broadcast %4 : vector<16x1xf32> to vector<16x64xf32>
    %13 = arith.subf %0, %12 : vector<16x64xf32>
    %cst_4 = arith.constant 9.99999974E-6 : f32
    %14 = vector.broadcast %cst_4 : f32 to vector<16x1xf32>
    %15 = arith.addf %11, %14 : vector<16x1xf32>
    %16 = math.rsqrt %15 : vector<16x1xf32>
    %17 = vector.broadcast %16 : vector<16x1xf32> to vector<16x64xf32>
    %18 = arith.mulf %13, %17 : vector<16x64xf32>
    %c0_5 = arith.constant 0 : index
    %c0_6 = arith.constant 0 : index
    %19 = vector.load %arg2[%c0_5, %c0_6] : memref<1x64xf32, #tpu.memory_space<vmem>>, vector<1x64xf32>
    %20 = vector.broadcast %19 : vector<1x64xf32> to vector<16x64xf32>
    %21 = arith.mulf %18, %20 : vector<16x64xf32>
    %c0_7 = arith.constant 0 : index
    %c0_8 = arith.constant 0 : index
    %22 = vector.load %arg3[%c0_7, %c0_8] : memref<1x64xf32, #tpu.memory_space<vmem>>, vector<1x64xf32>
    %23 = vector.broadcast %22 : vector<1x64xf32> to vector<16x64xf32>
    %24 = arith.addf %21, %23 : vector<16x64xf32>
    %25 = arith.truncf %24 : vector<16x64xf32> to vector<16x64xbf16>
    %c0_9 = arith.constant 0 : index
    %c0_10 = arith.constant 0 : index
    %26 = vector.load %arg4[%c0_9, %c0_10] : memref<64x192xbf16, #tpu.memory_space<vmem>>, vector<64x192xbf16>
    %cst_11 = arith.constant dense<0.000000e+00> : vector<16x192xf32>
    %27 = tpu.matmul %25, %26, %cst_11 {dimension_numbers = #tpu.dot_dimension_numbers<[1], [0], [0], [1], [0, 0, 1, 1], [], []>} : vector<16x64xbf16>, vector<64x192xbf16>, vector<16x192xf32> -> vector<16x192xf32>
    %c0_12 = arith.constant 0 : index
    %c0_13 = arith.constant 0 : index
    %28 = vector.load %arg5[%c0_12, %c0_13] : memref<1x192xf32, #tpu.memory_space<vmem>>, vector<1x192xf32>
    %29 = vector.broadcast %28 : vector<1x192xf32> to vector<16x192xf32>
    %30 = arith.mulf %27, %29 : vector<16x192xf32>
    %c0_14 = arith.constant 0 : index
    %c0_15 = arith.constant 0 : index
    %31 = vector.load %arg6[%c0_14, %c0_15] : memref<16x192xf32, #tpu.memory_space<vmem>>, vector<16x192xf32>
    tpu.vector_store %arg6[%c0_14, %c0_15], %30 {strides = array<i32>} : memref<16x192xf32, #tpu.memory_space<vmem>>, vector<16x192xf32>,
    return
  }
  func.func @transform_0(%arg0: i32) -> (i32, i32) {
    %c0_i32 = arith.constant 0 : i32
    %c0_i32_0 = arith.constant 0 : i32
    return %arg0, %c0_i32 : i32, i32
  }
  func.func @transform_1(%arg0: i32) -> (i32, i32) {
    %c0_i32 = arith.constant 0 : i32
    %c0_i32_0 = arith.constant 0 : i32
    %c0_i32_1 = arith.constant 0 : i32
    return %c0_i32, %c0_i32_0 : i32, i32
  }
  func.func @transform_2(%arg0: i32) -> (i32, i32) {
    %c0_i32 = arith.constant 0 : i32
    %c0_i32_0 = arith.constant 0 : i32
    %c0_i32_1 = arith.constant 0 : i32
    return %c0_i32, %c0_i32_0 : i32, i32
  }
  func.func @transform_3(%arg0: i32) -> (i32, i32) {
    %c0_i32 = arith.constant 0 : i32
    %c0_i32_0 = arith.constant 0 : i32
    %c0_i32_1 = arith.constant 0 : i32
    return %c0_i32, %c0_i32_0 : i32, i32
  }
  func.func @transform_4(%arg0: i32) -> (i32, i32) {
    %c0_i32 = arith.constant 0 : i32
    %c0_i32_0 = arith.constant 0 : i32
    %c0_i32_1 = arith.constant 0 : i32
    return %c0_i32, %c0_i32_0 : i32, i32
  }
  func.func @transform_5(%arg0: i32) -> (i32, i32) {
    %c0_i32 = arith.constant 0 : i32
    %c0_i32_0 = arith.constant 0 : i32
    return %arg0, %c0_i32 : i32, i32
  }
}

module attributes {stable_mosaic.version = 11 : i64} {
  func.func @_fused_linear_kernel(%arg0: i32, %arg1: memref<16x64xf32, #tpu.memory_space<vmem>>, %arg2: memref<1x64xf32, #tpu.memory_space<vmem>>, %arg3: memref<1x64xf32, #tpu.memory_space<vmem>>, %arg4: memref<64x64xbf16, #tpu.memory_space<vmem>>, %arg5: memref<1x64xf32, #tpu.memory_space<vmem>>, %arg6: memref<1x64xf32, #tpu.memory_space<vmem>>, %arg7: memref<16x64xf32, #tpu.memory_space<vmem>>) attributes {dimension_semantics = [#tpu.dimension_semantics<parallel>], iteration_bounds = array<i64: 1>, scalar_prefetch = 0 : i64, scratch_operands = 0 : i64, tpu.core_type = #tpu.core_type<tc>, window_params = [{transform_indices = @transform_0, window_bounds = array<i64: 16, 64>}, {pipeline_mode = #tpu.pipeline_mode<synchronous>, transform_indices = @transform_1, window_bounds = array<i64: 1, 64>}, {pipeline_mode = #tpu.pipeline_mode<synchronous>, transform_indices = @transform_2, window_bounds = array<i64: 1, 64>}, {pipeline_mode = #tpu.pipeline_mode<synchronous>, transform_indices = @transform_3, window_bounds = array<i64: 64, 64>}, {pipeline_mode = #tpu.pipeline_mode<synchronous>, transform_indices = @transform_4, window_bounds = array<i64: 1, 64>}, {pipeline_mode = #tpu.pipeline_mode<synchronous>, transform_indices = @transform_5, window_bounds = array<i64: 1, 64>}, {transform_indices = @transform_6, window_bounds = array<i64: 16, 64>}]} {
    %c0 = arith.constant 0 : index
    %c0_0 = arith.constant 0 : index
    %0 = vector.load %arg1[%c0, %c0_0] : memref<16x64xf32, #tpu.memory_space<vmem>>, vector<16x64xf32>
    %cst = arith.constant dense<0.000000e+00> : vector<16xf32>
    %1 = vector.multi_reduction <add>, %0, %cst [1] : vector<16x64xf32> to vector<16xf32>
    %2 = vector.shape_cast %1 : vector<16xf32> to vector<16x1xf32>
    %cst_1 = arith.constant 6.400000e+01 : f32
    %3 = vector.broadcast %cst_1 : f32 to vector<16x1xf32>
    %4 = arith.divf %2, %3 : vector<16x1xf32>
    %5 = vector.broadcast %4 : vector<16x1xf32> to vector<16x64xf32>
    %6 = arith.subf %0, %5 : vector<16x64xf32>
    %7 = arith.mulf %6, %6 : vector<16x64xf32>
    %cst_2 = arith.constant dense<0.000000e+00> : vector<16xf32>
    %8 = vector.multi_reduction <add>, %7, %cst_2 [1] : vector<16x64xf32> to vector<16xf32>
    %9 = vector.shape_cast %8 : vector<16xf32> to vector<16x1xf32>
    %cst_3 = arith.constant 6.400000e+01 : f32
    %10 = vector.broadcast %cst_3 : f32 to vector<16x1xf32>
    %11 = arith.divf %9, %10 : vector<16x1xf32>
    %12 = vector.broadcast %4 : vector<16x1xf32> to vector<16x64xf32>
    %13 = arith.subf %0, %12 : vector<16x64xf32>
    %cst_4 = arith.constant 9.99999974E-6 : f32
    %14 = vector.broadcast %cst_4 : f32 to vector<16x1xf32>
    %15 = arith.addf %11, %14 : vector<16x1xf32>
    %16 = math.rsqrt %15 : vector<16x1xf32>
    %17 = vector.broadcast %16 : vector<16x1xf32> to vector<16x64xf32>
    %18 = arith.mulf %13, %17 : vector<16x64xf32>
    %c0_5 = arith.constant 0 : index
    %c0_6 = arith.constant 0 : index
    %19 = vector.load %arg2[%c0_5, %c0_6] : memref<1x64xf32, #tpu.memory_space<vmem>>, vector<1x64xf32>
    %20 = vector.broadcast %19 : vector<1x64xf32> to vector<16x64xf32>
    %21 = arith.mulf %18, %20 : vector<16x64xf32>
    %c0_7 = arith.constant 0 : index
    %c0_8 = arith.constant 0 : index
    %22 = vector.load %arg3[%c0_7, %c0_8] : memref<1x64xf32, #tpu.memory_space<vmem>>, vector<1x64xf32>
    %23 = vector.broadcast %22 : vector<1x64xf32> to vector<16x64xf32>
    %24 = arith.addf %21, %23 : vector<16x64xf32>
    %25 = arith.truncf %24 : vector<16x64xf32> to vector<16x64xbf16>
    %c0_9 = arith.constant 0 : index
    %c0_10 = arith.constant 0 : index
    %26 = vector.load %arg4[%c0_9, %c0_10] : memref<64x64xbf16, #tpu.memory_space<vmem>>, vector<64x64xbf16>
    %cst_11 = arith.constant dense<0.000000e+00> : vector<16x64xf32>
    %27 = tpu.matmul %25, %26, %cst_11 {dimension_numbers = #tpu.dot_dimension_numbers<[1], [0], [0], [1], [0, 0, 1, 1], [], []>} : vector<16x64xbf16>, vector<64x64xbf16>, vector<16x64xf32> -> vector<16x64xf32>
    %c0_12 = arith.constant 0 : index
    %c0_13 = arith.constant 0 : index
    %28 = vector.load %arg5[%c0_12, %c0_13] : memref<1x64xf32, #tpu.memory_space<vmem>>, vector<1x64xf32>
    %29 = vector.broadcast %28 : vector<1x64xf32> to vector<16x64xf32>
    %30 = arith.addf %27, %29 : vector<16x64xf32>
    %cst_14 = arith.constant 5.000000e-01 : f32
    %31 = vector.broadcast %cst_14 : f32 to vector<16x64xf32>
    %32 = arith.mulf %31, %30 : vector<16x64xf32>
    %cst_15 = arith.constant 4.471500e-02 : f32
    %33 = vector.broadcast %cst_15 : f32 to vector<16x64xf32>
    %34 = arith.mulf %33, %30 : vector<16x64xf32>
    %35 = arith.mulf %34, %30 : vector<16x64xf32>
    %36 = arith.mulf %35, %30 : vector<16x64xf32>
    %37 = arith.addf %30, %36 : vector<16x64xf32>
    %cst_16 = arith.constant 0.797884583 : f32
    %38 = vector.broadcast %cst_16 : f32 to vector<16x64xf32>
    %39 = arith.mulf %38, %37 : vector<16x64xf32>
    %40 = math.tanh %39 : vector<16x64xf32>
    %cst_17 = arith.constant 1.000000e+00 : f32
    %41 = vector.broadcast %cst_17 : f32 to vector<16x64xf32>
    %42 = arith.addf %41, %40 : vector<16x64xf32>
    %43 = arith.mulf %32, %42 : vector<16x64xf32>
    %c0_18 = arith.constant 0 : index
    %c0_19 = arith.constant 0 : index
    %44 = vector.load %arg6[%c0_18, %c0_19] : memref<1x64xf32, #tpu.memory_space<vmem>>, vector<1x64xf32>
    %45 = vector.broadcast %44 : vector<1x64xf32> to vector<16x64xf32>
    %46 = arith.mulf %43, %45 : vector<16x64xf32>
    %c0_20 = arith.constant 0 : index
    %c0_21 = arith.constant 0 : index
    %47 = vector.load %arg7[%c0_20, %c0_21] : memref<16x64xf32, #tpu.memory_space<vmem>>, vector<16x64xf32>
    tpu.vector_store %arg7[%c0_20, %c0_21], %46 {strides = array<i32>} : memref<16x64xf32, #tpu.memory_space<vmem>>, vector<16x64xf32>,
    return
  }
  func.func @transform_0(%arg0: i32) -> (i32, i32) {
    %c0_i32 = arith.constant 0 : i32
    %c0_i32_0 = arith.constant 0 : i32
    return %arg0, %c0_i32 : i32, i32
  }
  func.func @transform_1(%arg0: i32) -> (i32, i32) {
    %c0_i32 = arith.constant 0 : i32
    %c0_i32_0 = arith.constant 0 : i32
    %c0_i32_1 = arith.constant 0 : i32
    return %c0_i32, %c0_i32_0 : i32, i32
  }
  func.func @transform_2(%arg0: i32) -> (i32, i32) {
    %c0_i32 = arith.constant 0 : i32
    %c0_i32_0 = arith.constant 0 : i32
    %c0_i32_1 = arith.constant 0 : i32
    return %c0_i32, %c0_i32_0 : i32, i32
  }
  func.func @transform_3(%arg0: i32) -> (i32, i32) {
    %c0_i32 = arith.constant 0 : i32
    %c0_i32_0 = arith.constant 0 : i32
    %c0_i32_1 = arith.constant 0 : i32
    return %c0_i32, %c0_i32_0 : i32, i32
  }
  func.func @transform_4(%arg0: i32) -> (i32, i32) {
    %c0_i32 = arith.constant 0 : i32
    %c0_i32_0 = arith.constant 0 : i32
    %c0_i32_1 = arith.constant 0 : i32
    return %c0_i32, %c0_i32_0 : i32, i32
  }
  func.func @transform_5(%arg0: i32) -> (i32, i32) {
    %c0_i32 = arith.constant 0 : i32
    %c0_i32_0 = arith.constant 0 : i32
    %c0_i32_1 = arith.constant 0 : i32
    return %c0_i32, %c0_i32_0 : i32, i32
  }
  func.func @transform_6(%arg0: i32) -> (i32, i32) {
    %c0_i32 = arith.constant 0 : i32
    %c0_i32_0 = arith.constant 0 : i32
    return %arg0, %c0_i32 : i32, i32
  }
}

module attributes {stable_mosaic.version = 11 : i64} {
  func.func @_attn_out_kernel(%arg0: i32, %arg1: memref<1x8x192xf32, #tpu.memory_space<vmem>>, %arg2: memref<1x8x64xf32, #tpu.memory_space<vmem>>, %arg3: memref<64x64xbf16, #tpu.memory_space<vmem>>, %arg4: memref<1x64xf32, #tpu.memory_space<vmem>>, %arg5: memref<1x8x64xf32, #tpu.memory_space<vmem>>) attributes {dimension_semantics = [#tpu.dimension_semantics<parallel>], iteration_bounds = array<i64: 2>, scalar_prefetch = 0 : i64, scratch_operands = 0 : i64, tpu.core_type = #tpu.core_type<tc>, window_params = [{transform_indices = @transform_0, window_bounds = array<i64: 1, 8, 192>}, {transform_indices = @transform_1, window_bounds = array<i64: 1, 8, 64>}, {pipeline_mode = #tpu.pipeline_mode<synchronous>, transform_indices = @transform_2, window_bounds = array<i64: 64, 64>}, {pipeline_mode = #tpu.pipeline_mode<synchronous>, transform_indices = @transform_3, window_bounds = array<i64: 1, 64>}, {transform_indices = @transform_4, window_bounds = array<i64: 1, 8, 64>}]} {
    %c0 = arith.constant 0 : index
    %c0_0 = arith.constant 0 : index
    %0 = vector.load %arg4[%c0, %c0_0] : memref<1x64xf32, #tpu.memory_space<vmem>>, vector<1x64xf32>
    %c0_1 = arith.constant 0 : index
    %c0_2 = arith.constant 0 : index
    %c0_3 = arith.constant 0 : index
    %1 = vector.load %arg2[%c0_1, %c0_2, %c0_3] : memref<1x8x64xf32, #tpu.memory_space<vmem>>, vector<1x8x64xf32>
    %2 = vector.shape_cast %1 : vector<1x8x64xf32> to vector<8x64xf32>
    %3 = vector.broadcast %0 : vector<1x64xf32> to vector<8x64xf32>
    %4 = arith.addf %3, %2 : vector<8x64xf32>
    %c0_4 = arith.constant 0 : index
    %c0_5 = arith.constant 0 : index
    %c0_6 = arith.constant 0 : index
    %5 = vector.load %arg1[%c0_4, %c0_5, %c0_6] : memref<1x8x192xf32, #tpu.memory_space<vmem>>, vector<1x8x16xf32>
    %6 = vector.shape_cast %5 : vector<1x8x16xf32> to vector<8x16xf32>
    %7 = arith.truncf %6 : vector<8x16xf32> to vector<8x16xbf16>
    %c0_7 = arith.constant 0 : index
    %c0_8 = arith.constant 0 : index
    %c64 = arith.constant 64 : index
    %8 = vector.load %arg1[%c0_7, %c0_8, %c64] : memref<1x8x192xf32, #tpu.memory_space<vmem>>, vector<1x8x16xf32>
    %9 = vector.shape_cast %8 : vector<1x8x16xf32> to vector<8x16xf32>
    %10 = arith.truncf %9 : vector<8x16xf32> to vector<8x16xbf16>
    %c0_9 = arith.constant 0 : index
    %c0_10 = arith.constant 0 : index
    %c128 = arith.constant 128 : index
    %11 = vector.load %arg1[%c0_9, %c0_10, %c128] : memref<1x8x192xf32, #tpu.memory_space<vmem>>, vector<1x8x16xf32>
    %12 = vector.shape_cast %11 : vector<1x8x16xf32> to vector<8x16xf32>
    %13 = arith.truncf %12 : vector<8x16xf32> to vector<8x16xbf16>
    %cst = arith.constant dense<0.000000e+00> : vector<8x8xf32>
    %14 = tpu.matmul %7, %10, %cst {dimension_numbers = #tpu.dot_dimension_numbers<[1], [1], [0], [0], [0, 0, 1, 0], [], []>} : vector<8x16xbf16>, vector<8x16xbf16>, vector<8x8xf32> -> vector<8x8xf32>
    %cst_11 = arith.constant dense<0xFF800000> : vector<8xf32>
    %15 = vector.multi_reduction <maximumf>, %14, %cst_11 [1] : vector<8x8xf32> to vector<8xf32>
    %16 = vector.shape_cast %15 : vector<8xf32> to vector<8x1xf32>
    %17 = vector.broadcast %16 : vector<8x1xf32> to vector<8x8xf32>
    %18 = arith.subf %14, %17 : vector<8x8xf32>
    %19 = math.exp %18 : vector<8x8xf32>
    %cst_12 = arith.constant dense<0.000000e+00> : vector<8xf32>
    %20 = vector.multi_reduction <add>, %19, %cst_12 [1] : vector<8x8xf32> to vector<8xf32>
    %21 = vector.shape_cast %20 : vector<8xf32> to vector<8x1xf32>
    %22 = tpu.reciprocal %21 {approx = true} : vector<8x1xf32> -> vector<8x1xf32>
    %23 = vector.broadcast %22 : vector<8x1xf32> to vector<8x8xf32>
    %24 = arith.mulf %19, %23 : vector<8x8xf32>
    %25 = arith.truncf %24 : vector<8x8xf32> to vector<8x8xbf16>
    %cst_13 = arith.constant dense<0.000000e+00> : vector<8x16xf32>
    %26 = tpu.matmul %25, %13, %cst_13 {dimension_numbers = #tpu.dot_dimension_numbers<[1], [0], [0], [1], [0, 0, 1, 1], [], []>} : vector<8x8xbf16>, vector<8x16xbf16>, vector<8x16xf32> -> vector<8x16xf32>
    %27 = arith.truncf %26 : vector<8x16xf32> to vector<8x16xbf16>
    %c0_14 = arith.constant 0 : index
    %c0_15 = arith.constant 0 : index
    %28 = vector.load %arg3[%c0_14, %c0_15] : memref<64x64xbf16, #tpu.memory_space<vmem>>, vector<16x64xbf16>
    %cst_16 = arith.constant dense<0.000000e+00> : vector<8x64xf32>
    %29 = tpu.matmul %27, %28, %cst_16 {dimension_numbers = #tpu.dot_dimension_numbers<[1], [0], [0], [1], [0, 0, 1, 1], [], []>} : vector<8x16xbf16>, vector<16x64xbf16>, vector<8x64xf32> -> vector<8x64xf32>
    %30 = arith.addf %4, %29 : vector<8x64xf32>
    %c0_17 = arith.constant 0 : index
    %c0_18 = arith.constant 0 : index
    %c16 = arith.constant 16 : index
    %31 = vector.load %arg1[%c0_17, %c0_18, %c16] : memref<1x8x192xf32, #tpu.memory_space<vmem>>, vector<1x8x16xf32>
    %32 = vector.shape_cast %31 : vector<1x8x16xf32> to vector<8x16xf32>
    %33 = arith.truncf %32 : vector<8x16xf32> to vector<8x16xbf16>
    %c0_19 = arith.constant 0 : index
    %c0_20 = arith.constant 0 : index
    %c80 = arith.constant 80 : index
    %34 = vector.load %arg1[%c0_19, %c0_20, %c80] : memref<1x8x192xf32, #tpu.memory_space<vmem>>, vector<1x8x16xf32>
    %35 = vector.shape_cast %34 : vector<1x8x16xf32> to vector<8x16xf32>
    %36 = arith.truncf %35 : vector<8x16xf32> to vector<8x16xbf16>
    %c0_21 = arith.constant 0 : index
    %c0_22 = arith.constant 0 : index
    %c144 = arith.constant 144 : index
    %37 = vector.load %arg1[%c0_21, %c0_22, %c144] : memref<1x8x192xf32, #tpu.memory_space<vmem>>, vector<1x8x16xf32>
    %38 = vector.shape_cast %37 : vector<1x8x16xf32> to vector<8x16xf32>
    %39 = arith.truncf %38 : vector<8x16xf32> to vector<8x16xbf16>
    %cst_23 = arith.constant dense<0.000000e+00> : vector<8x8xf32>
    %40 = tpu.matmul %33, %36, %cst_23 {dimension_numbers = #tpu.dot_dimension_numbers<[1], [1], [0], [0], [0, 0, 1, 0], [], []>} : vector<8x16xbf16>, vector<8x16xbf16>, vector<8x8xf32> -> vector<8x8xf32>
    %cst_24 = arith.constant dense<0xFF800000> : vector<8xf32>
    %41 = vector.multi_reduction <maximumf>, %40, %cst_24 [1] : vector<8x8xf32> to vector<8xf32>
    %42 = vector.shape_cast %41 : vector<8xf32> to vector<8x1xf32>
    %43 = vector.broadcast %42 : vector<8x1xf32> to vector<8x8xf32>
    %44 = arith.subf %40, %43 : vector<8x8xf32>
    %45 = math.exp %44 : vector<8x8xf32>
    %cst_25 = arith.constant dense<0.000000e+00> : vector<8xf32>
    %46 = vector.multi_reduction <add>, %45, %cst_25 [1] : vector<8x8xf32> to vector<8xf32>
    %47 = vector.shape_cast %46 : vector<8xf32> to vector<8x1xf32>
    %48 = tpu.reciprocal %47 {approx = true} : vector<8x1xf32> -> vector<8x1xf32>
    %49 = vector.broadcast %48 : vector<8x1xf32> to vector<8x8xf32>
    %50 = arith.mulf %45, %49 : vector<8x8xf32>
    %51 = arith.truncf %50 : vector<8x8xf32> to vector<8x8xbf16>
    %cst_26 = arith.constant dense<0.000000e+00> : vector<8x16xf32>
    %52 = tpu.matmul %51, %39, %cst_26 {dimension_numbers = #tpu.dot_dimension_numbers<[1], [0], [0], [1], [0, 0, 1, 1], [], []>} : vector<8x8xbf16>, vector<8x16xbf16>, vector<8x16xf32> -> vector<8x16xf32>
    %53 = arith.truncf %52 : vector<8x16xf32> to vector<8x16xbf16>
    %c16_27 = arith.constant 16 : index
    %c0_28 = arith.constant 0 : index
    %54 = vector.load %arg3[%c16_27, %c0_28] : memref<64x64xbf16, #tpu.memory_space<vmem>>, vector<16x64xbf16>
    %cst_29 = arith.constant dense<0.000000e+00> : vector<8x64xf32>
    %55 = tpu.matmul %53, %54, %cst_29 {dimension_numbers = #tpu.dot_dimension_numbers<[1], [0], [0], [1], [0, 0, 1, 1], [], []>} : vector<8x16xbf16>, vector<16x64xbf16>, vector<8x64xf32> -> vector<8x64xf32>
    %56 = arith.addf %30, %55 : vector<8x64xf32>
    %c0_30 = arith.constant 0 : index
    %c0_31 = arith.constant 0 : index
    %c32 = arith.constant 32 : index
    %57 = vector.load %arg1[%c0_30, %c0_31, %c32] : memref<1x8x192xf32, #tpu.memory_space<vmem>>, vector<1x8x16xf32>
    %58 = vector.shape_cast %57 : vector<1x8x16xf32> to vector<8x16xf32>
    %59 = arith.truncf %58 : vector<8x16xf32> to vector<8x16xbf16>
    %c0_32 = arith.constant 0 : index
    %c0_33 = arith.constant 0 : index
    %c96 = arith.constant 96 : index
    %60 = vector.load %arg1[%c0_32, %c0_33, %c96] : memref<1x8x192xf32, #tpu.memory_space<vmem>>, vector<1x8x16xf32>
    %61 = vector.shape_cast %60 : vector<1x8x16xf32> to vector<8x16xf32>
    %62 = arith.truncf %61 : vector<8x16xf32> to vector<8x16xbf16>
    %c0_34 = arith.constant 0 : index
    %c0_35 = arith.constant 0 : index
    %c160 = arith.constant 160 : index
    %63 = vector.load %arg1[%c0_34, %c0_35, %c160] : memref<1x8x192xf32, #tpu.memory_space<vmem>>, vector<1x8x16xf32>
    %64 = vector.shape_cast %63 : vector<1x8x16xf32> to vector<8x16xf32>
    %65 = arith.truncf %64 : vector<8x16xf32> to vector<8x16xbf16>
    %cst_36 = arith.constant dense<0.000000e+00> : vector<8x8xf32>
    %66 = tpu.matmul %59, %62, %cst_36 {dimension_numbers = #tpu.dot_dimension_numbers<[1], [1], [0], [0], [0, 0, 1, 0], [], []>} : vector<8x16xbf16>, vector<8x16xbf16>, vector<8x8xf32> -> vector<8x8xf32>
    %cst_37 = arith.constant dense<0xFF800000> : vector<8xf32>
    %67 = vector.multi_reduction <maximumf>, %66, %cst_37 [1] : vector<8x8xf32> to vector<8xf32>
    %68 = vector.shape_cast %67 : vector<8xf32> to vector<8x1xf32>
    %69 = vector.broadcast %68 : vector<8x1xf32> to vector<8x8xf32>
    %70 = arith.subf %66, %69 : vector<8x8xf32>
    %71 = math.exp %70 : vector<8x8xf32>
    %cst_38 = arith.constant dense<0.000000e+00> : vector<8xf32>
    %72 = vector.multi_reduction <add>, %71, %cst_38 [1] : vector<8x8xf32> to vector<8xf32>
    %73 = vector.shape_cast %72 : vector<8xf32> to vector<8x1xf32>
    %74 = tpu.reciprocal %73 {approx = true} : vector<8x1xf32> -> vector<8x1xf32>
    %75 = vector.broadcast %74 : vector<8x1xf32> to vector<8x8xf32>
    %76 = arith.mulf %71, %75 : vector<8x8xf32>
    %77 = arith.truncf %76 : vector<8x8xf32> to vector<8x8xbf16>
    %cst_39 = arith.constant dense<0.000000e+00> : vector<8x16xf32>
    %78 = tpu.matmul %77, %65, %cst_39 {dimension_numbers = #tpu.dot_dimension_numbers<[1], [0], [0], [1], [0, 0, 1, 1], [], []>} : vector<8x8xbf16>, vector<8x16xbf16>, vector<8x16xf32> -> vector<8x16xf32>
    %79 = arith.truncf %78 : vector<8x16xf32> to vector<8x16xbf16>
    %c32_40 = arith.constant 32 : index
    %c0_41 = arith.constant 0 : index
    %80 = vector.load %arg3[%c32_40, %c0_41] : memref<64x64xbf16, #tpu.memory_space<vmem>>, vector<16x64xbf16>
    %cst_42 = arith.constant dense<0.000000e+00> : vector<8x64xf32>
    %81 = tpu.matmul %79, %80, %cst_42 {dimension_numbers = #tpu.dot_dimension_numbers<[1], [0], [0], [1], [0, 0, 1, 1], [], []>} : vector<8x16xbf16>, vector<16x64xbf16>, vector<8x64xf32> -> vector<8x64xf32>
    %82 = arith.addf %56, %81 : vector<8x64xf32>
    %c0_43 = arith.constant 0 : index
    %c0_44 = arith.constant 0 : index
    %c48 = arith.constant 48 : index
    %83 = vector.load %arg1[%c0_43, %c0_44, %c48] : memref<1x8x192xf32, #tpu.memory_space<vmem>>, vector<1x8x16xf32>
    %84 = vector.shape_cast %83 : vector<1x8x16xf32> to vector<8x16xf32>
    %85 = arith.truncf %84 : vector<8x16xf32> to vector<8x16xbf16>
    %c0_45 = arith.constant 0 : index
    %c0_46 = arith.constant 0 : index
    %c112 = arith.constant 112 : index
    %86 = vector.load %arg1[%c0_45, %c0_46, %c112] : memref<1x8x192xf32, #tpu.memory_space<vmem>>, vector<1x8x16xf32>
    %87 = vector.shape_cast %86 : vector<1x8x16xf32> to vector<8x16xf32>
    %88 = arith.truncf %87 : vector<8x16xf32> to vector<8x16xbf16>
    %c0_47 = arith.constant 0 : index
    %c0_48 = arith.constant 0 : index
    %c176 = arith.constant 176 : index
    %89 = vector.load %arg1[%c0_47, %c0_48, %c176] : memref<1x8x192xf32, #tpu.memory_space<vmem>>, vector<1x8x16xf32>
    %90 = vector.shape_cast %89 : vector<1x8x16xf32> to vector<8x16xf32>
    %91 = arith.truncf %90 : vector<8x16xf32> to vector<8x16xbf16>
    %cst_49 = arith.constant dense<0.000000e+00> : vector<8x8xf32>
    %92 = tpu.matmul %85, %88, %cst_49 {dimension_numbers = #tpu.dot_dimension_numbers<[1], [1], [0], [0], [0, 0, 1, 0], [], []>} : vector<8x16xbf16>, vector<8x16xbf16>, vector<8x8xf32> -> vector<8x8xf32>
    %cst_50 = arith.constant dense<0xFF800000> : vector<8xf32>
    %93 = vector.multi_reduction <maximumf>, %92, %cst_50 [1] : vector<8x8xf32> to vector<8xf32>
    %94 = vector.shape_cast %93 : vector<8xf32> to vector<8x1xf32>
    %95 = vector.broadcast %94 : vector<8x1xf32> to vector<8x8xf32>
    %96 = arith.subf %92, %95 : vector<8x8xf32>
    %97 = math.exp %96 : vector<8x8xf32>
    %cst_51 = arith.constant dense<0.000000e+00> : vector<8xf32>
    %98 = vector.multi_reduction <add>, %97, %cst_51 [1] : vector<8x8xf32> to vector<8xf32>
    %99 = vector.shape_cast %98 : vector<8xf32> to vector<8x1xf32>
    %100 = tpu.reciprocal %99 {approx = true} : vector<8x1xf32> -> vector<8x1xf32>
    %101 = vector.broadcast %100 : vector<8x1xf32> to vector<8x8xf32>
    %102 = arith.mulf %97, %101 : vector<8x8xf32>
    %103 = arith.truncf %102 : vector<8x8xf32> to vector<8x8xbf16>
    %cst_52 = arith.constant dense<0.000000e+00> : vector<8x16xf32>
    %104 = tpu.matmul %103, %91, %cst_52 {dimension_numbers = #tpu.dot_dimension_numbers<[1], [0], [0], [1], [0, 0, 1, 1], [], []>} : vector<8x8xbf16>, vector<8x16xbf16>, vector<8x16xf32> -> vector<8x16xf32>
    %105 = arith.truncf %104 : vector<8x16xf32> to vector<8x16xbf16>
    %c48_53 = arith.constant 48 : index
    %c0_54 = arith.constant 0 : index
    %106 = vector.load %arg3[%c48_53, %c0_54] : memref<64x64xbf16, #tpu.memory_space<vmem>>, vector<16x64xbf16>
    %cst_55 = arith.constant dense<0.000000e+00> : vector<8x64xf32>
    %107 = tpu.matmul %105, %106, %cst_55 {dimension_numbers = #tpu.dot_dimension_numbers<[1], [0], [0], [1], [0, 0, 1, 1], [], []>} : vector<8x16xbf16>, vector<16x64xbf16>, vector<8x64xf32> -> vector<8x64xf32>
    %108 = arith.addf %82, %107 : vector<8x64xf32>
    %c0_56 = arith.constant 0 : index
    %c0_57 = arith.constant 0 : index
    %c0_58 = arith.constant 0 : index
    %109 = vector.load %arg5[%c0_56, %c0_57, %c0_58] : memref<1x8x64xf32, #tpu.memory_space<vmem>>, vector<1x8x64xf32>
    %110 = vector.shape_cast %109 : vector<1x8x64xf32> to vector<8x64xf32>
    %111 = vector.shape_cast %108 : vector<8x64xf32> to vector<1x8x64xf32>
    tpu.vector_store %arg5[%c0_56, %c0_57, %c0_58], %111 {strides = array<i32>} : memref<1x8x64xf32, #tpu.memory_space<vmem>>, vector<1x8x64xf32>,
    return
  }
  func.func @transform_0(%arg0: i32) -> (i32, i32, i32) {
    %c0_i32 = arith.constant 0 : i32
    %c0_i32_0 = arith.constant 0 : i32
    %c0_i32_1 = arith.constant 0 : i32
    return %arg0, %c0_i32, %c0_i32_0 : i32, i32, i32
  }
  func.func @transform_1(%arg0: i32) -> (i32, i32, i32) {
    %c0_i32 = arith.constant 0 : i32
    %c0_i32_0 = arith.constant 0 : i32
    %c0_i32_1 = arith.constant 0 : i32
    return %arg0, %c0_i32, %c0_i32_0 : i32, i32, i32
  }
  func.func @transform_2(%arg0: i32) -> (i32, i32) {
    %c0_i32 = arith.constant 0 : i32
    %c0_i32_0 = arith.constant 0 : i32
    %c0_i32_1 = arith.constant 0 : i32
    return %c0_i32, %c0_i32_0 : i32, i32
  }
  func.func @transform_3(%arg0: i32) -> (i32, i32) {
    %c0_i32 = arith.constant 0 : i32
    %c0_i32_0 = arith.constant 0 : i32
    %c0_i32_1 = arith.constant 0 : i32
    return %c0_i32, %c0_i32_0 : i32, i32
  }
  func.func @transform_4(%arg0: i32) -> (i32, i32, i32) {
    %c0_i32 = arith.constant 0 : i32
    %c0_i32_0 = arith.constant 0 : i32
    %c0_i32_1 = arith.constant 0 : i32
    return %arg0, %c0_i32, %c0_i32_0 : i32, i32, i32
  }
}

module attributes {stable_mosaic.version = 11 : i64} {
  func.func @_fused_linear_kernel(%arg0: i32, %arg1: memref<16x64xf32, #tpu.memory_space<vmem>>, %arg2: memref<64x64xbf16, #tpu.memory_space<vmem>>, %arg3: memref<1x64xf32, #tpu.memory_space<vmem>>, %arg4: memref<16x64xf32, #tpu.memory_space<vmem>>, %arg5: memref<16x64xf32, #tpu.memory_space<vmem>>) attributes {dimension_semantics = [#tpu.dimension_semantics<parallel>], iteration_bounds = array<i64: 1>, scalar_prefetch = 0 : i64, scratch_operands = 0 : i64, tpu.core_type = #tpu.core_type<tc>, window_params = [{transform_indices = @transform_0, window_bounds = array<i64: 16, 64>}, {pipeline_mode = #tpu.pipeline_mode<synchronous>, transform_indices = @transform_1, window_bounds = array<i64: 64, 64>}, {pipeline_mode = #tpu.pipeline_mode<synchronous>, transform_indices = @transform_2, window_bounds = array<i64: 1, 64>}, {transform_indices = @transform_3, window_bounds = array<i64: 16, 64>}, {transform_indices = @transform_4, window_bounds = array<i64: 16, 64>}]} {
    %c0 = arith.constant 0 : index
    %c0_0 = arith.constant 0 : index
    %0 = vector.load %arg1[%c0, %c0_0] : memref<16x64xf32, #tpu.memory_space<vmem>>, vector<16x64xf32>
    %1 = arith.truncf %0 : vector<16x64xf32> to vector<16x64xbf16>
    %c0_1 = arith.constant 0 : index
    %c0_2 = arith.constant 0 : index
    %2 = vector.load %arg2[%c0_1, %c0_2] : memref<64x64xbf16, #tpu.memory_space<vmem>>, vector<64x64xbf16>
    %cst = arith.constant dense<0.000000e+00> : vector<16x64xf32>
    %3 = tpu.matmul %1, %2, %cst {dimension_numbers = #tpu.dot_dimension_numbers<[1], [0], [0], [1], [0, 0, 1, 1], [], []>} : vector<16x64xbf16>, vector<64x64xbf16>, vector<16x64xf32> -> vector<16x64xf32>
    %c0_3 = arith.constant 0 : index
    %c0_4 = arith.constant 0 : index
    %4 = vector.load %arg3[%c0_3, %c0_4] : memref<1x64xf32, #tpu.memory_space<vmem>>, vector<1x64xf32>
    %5 = vector.broadcast %4 : vector<1x64xf32> to vector<16x64xf32>
    %6 = arith.addf %3, %5 : vector<16x64xf32>
    %c0_5 = arith.constant 0 : index
    %c0_6 = arith.constant 0 : index
    %7 = vector.load %arg4[%c0_5, %c0_6] : memref<16x64xf32, #tpu.memory_space<vmem>>, vector<16x64xf32>
    %8 = arith.addf %6, %7 : vector<16x64xf32>
    %c0_7 = arith.constant 0 : index
    %c0_8 = arith.constant 0 : index
    %9 = vector.load %arg5[%c0_7, %c0_8] : memref<16x64xf32, #tpu.memory_space<vmem>>, vector<16x64xf32>
    tpu.vector_store %arg5[%c0_7, %c0_8], %8 {strides = array<i32>} : memref<16x64xf32, #tpu.memory_space<vmem>>, vector<16x64xf32>,
    return
  }
  func.func @transform_0(%arg0: i32) -> (i32, i32) {
    %c0_i32 = arith.constant 0 : i32
    %c0_i32_0 = arith.constant 0 : i32
    return %arg0, %c0_i32 : i32, i32
  }
  func.func @transform_1(%arg0: i32) -> (i32, i32) {
    %c0_i32 = arith.constant 0 : i32
    %c0_i32_0 = arith.constant 0 : i32
    %c0_i32_1 = arith.constant 0 : i32
    return %c0_i32, %c0_i32_0 : i32, i32
  }
  func.func @transform_2(%arg0: i32) -> (i32, i32) {
    %c0_i32 = arith.constant 0 : i32
    %c0_i32_0 = arith.constant 0 : i32
    %c0_i32_1 = arith.constant 0 : i32
    return %c0_i32, %c0_i32_0 : i32, i32
  }
  func.func @transform_3(%arg0: i32) -> (i32, i32) {
    %c0_i32 = arith.constant 0 : i32
    %c0_i32_0 = arith.constant 0 : i32
    return %arg0, %c0_i32 : i32, i32
  }
  func.func @transform_4(%arg0: i32) -> (i32, i32) {
    %c0_i32 = arith.constant 0 : i32
    %c0_i32_0 = arith.constant 0 : i32
    return %arg0, %c0_i32 : i32, i32
  }
}

module attributes {stable_mosaic.version = 11 : i64} {
  func.func @_fused_linear_kernel(%arg0: i32, %arg1: memref<16x64xf32, #tpu.memory_space<vmem>>, %arg2: memref<64x64xbf16, #tpu.memory_space<vmem>>, %arg3: memref<1x64xf32, #tpu.memory_space<vmem>>, %arg4: memref<16x64xf32, #tpu.memory_space<vmem>>, %arg5: memref<16x64xf32, #tpu.memory_space<vmem>>) attributes {dimension_semantics = [#tpu.dimension_semantics<parallel>], iteration_bounds = array<i64: 1>, scalar_prefetch = 0 : i64, scratch_operands = 0 : i64, tpu.core_type = #tpu.core_type<tc>, window_params = [{transform_indices = @transform_0, window_bounds = array<i64: 16, 64>}, {pipeline_mode = #tpu.pipeline_mode<synchronous>, transform_indices = @transform_1, window_bounds = array<i64: 64, 64>}, {pipeline_mode = #tpu.pipeline_mode<synchronous>, transform_indices = @transform_2, window_bounds = array<i64: 1, 64>}, {transform_indices = @transform_3, window_bounds = array<i64: 16, 64>}, {transform_indices = @transform_4, window_bounds = array<i64: 16, 64>}]} {
    %c0 = arith.constant 0 : index
    %c0_0 = arith.constant 0 : index
    %0 = vector.load %arg1[%c0, %c0_0] : memref<16x64xf32, #tpu.memory_space<vmem>>, vector<16x64xf32>
    %1 = arith.truncf %0 : vector<16x64xf32> to vector<16x64xbf16>
    %c0_1 = arith.constant 0 : index
    %c0_2 = arith.constant 0 : index
    %2 = vector.load %arg2[%c0_1, %c0_2] : memref<64x64xbf16, #tpu.memory_space<vmem>>, vector<64x64xbf16>
    %cst = arith.constant dense<0.000000e+00> : vector<16x64xf32>
    %3 = tpu.matmul %1, %2, %cst {dimension_numbers = #tpu.dot_dimension_numbers<[1], [0], [0], [1], [0, 0, 1, 1], [], []>} : vector<16x64xbf16>, vector<64x64xbf16>, vector<16x64xf32> -> vector<16x64xf32>
    %c0_3 = arith.constant 0 : index
    %c0_4 = arith.constant 0 : index
    %4 = vector.load %arg3[%c0_3, %c0_4] : memref<1x64xf32, #tpu.memory_space<vmem>>, vector<1x64xf32>
    %5 = vector.broadcast %4 : vector<1x64xf32> to vector<16x64xf32>
    %6 = arith.addf %3, %5 : vector<16x64xf32>
    %c0_5 = arith.constant 0 : index
    %c0_6 = arith.constant 0 : index
    %7 = vector.load %arg4[%c0_5, %c0_6] : memref<16x64xf32, #tpu.memory_space<vmem>>, vector<16x64xf32>
    %8 = arith.addf %6, %7 : vector<16x64xf32>
    %c0_7 = arith.constant 0 : index
    %c0_8 = arith.constant 0 : index
    %9 = vector.load %arg5[%c0_7, %c0_8] : memref<16x64xf32, #tpu.memory_space<vmem>>, vector<16x64xf32>
    tpu.vector_store %arg5[%c0_7, %c0_8], %8 {strides = array<i32>} : memref<16x64xf32, #tpu.memory_space<vmem>>, vector<16x64xf32>,
    return
  }
  func.func @transform_0(%arg0: i32) -> (i32, i32) {
    %c0_i32 = arith.constant 0 : i32
    %c0_i32_0 = arith.constant 0 : i32
    return %arg0, %c0_i32 : i32, i32
  }
  func.func @transform_1(%arg0: i32) -> (i32, i32) {
    %c0_i32 = arith.constant 0 : i32
    %c0_i32_0 = arith.constant 0 : i32
    %c0_i32_1 = arith.constant 0 : i32
    return %c0_i32, %c0_i32_0 : i32, i32
  }
  func.func @transform_2(%arg0: i32) -> (i32, i32) {
    %c0_i32 = arith.constant 0 : i32
    %c0_i32_0 = arith.constant 0 : i32
    %c0_i32_1 = arith.constant 0 : i32
    return %c0_i32, %c0_i32_0 : i32, i32
  }
  func.func @transform_3(%arg0: i32) -> (i32, i32) {
    %c0_i32 = arith.constant 0 : i32
    %c0_i32_0 = arith.constant 0 : i32
    return %arg0, %c0_i32 : i32, i32
  }
  func.func @transform_4(%arg0: i32) -> (i32, i32) {
    %c0_i32 = arith.constant 0 : i32
    %c0_i32_0 = arith.constant 0 : i32
    return %arg0, %c0_i32 : i32, i32
  }
}

</mosaic_0001>

<llo_original>
// kernel: transformer_forward.10
$region0: #{transformer_forward.10}
  #allocation0 [shape = 'u32[]', space=smem, size = 0x4, offset = 0x4, fixed_abs, tag = 'smem constant byte address 0x4 - core index']
  #allocation1 [shape = 'u32[144,128]{1,0:T(1,128)}', space=vmem, size = 0x12000, scoped, tag = 'internal scratch']
  %s0 = inlined_call_operand.vmem [shape: f32[16,64], index: 0, kind: input, shape index: {}]
  %s1 = inlined_call_operand.vmem [shape: f32[1,64], index: 1, kind: input, shape index: {}]
  %s2 = inlined_call_operand.vmem [shape: f32[1,64], index: 2, kind: input, shape index: {}]
  %s3 = inlined_call_operand.vmem [shape: bf16[64,64], index: 3, kind: input, shape index: {}]
  %s4 = inlined_call_operand.vmem [shape: f32[1,64], index: 4, kind: input, shape index: {}]
  %s5 = inlined_call_operand.vmem [shape: f32[1,64], index: 5, kind: input, shape index: {}]
  %s6 = inlined_call_operand.vmem [shape: f32[16,64], index: 6, kind: output, shape index: {}]
  %s7 = sld [smem:[#allocation0]]
  $region34: #{transformer_forward.10} parent=0
    _
  %s9 = ssub.s32 1, %s7
  %s10 = scalar_select 0, %s9, %s7
  // Predicated region
  $region2: #{transformer_forward.10} parent=0 // pred_check
    _
  $region3: #{transformer_forward.10} parent=0 // pred_check_branch
    %12 = sbr.rel (0) target = $region5
  $region4: #{transformer_forward.10} parent=0 // pred_region
    _
  $region5: #{transformer_forward.10} parent=0 // pred_fallthru
    _
  // Predicated region
  $region6: #{transformer_forward.10} parent=0 // pred_check
    _
  $region7: #{transformer_forward.10} parent=0 // pred_check_branch
    %14 = sbr.rel (0) target = $region9
  $region8: #{transformer_forward.10} parent=0 // pred_region
    _
  $region9: #{transformer_forward.10} parent=0 // pred_fallthru
    _
  // Predicated region
  $region10: #{transformer_forward.10} parent=0 // pred_check
    _
  $region11: #{transformer_forward.10} parent=0 // pred_check_branch
    %16 = sbr.rel (0) target = $region13
  $region12: #{transformer_forward.10} parent=0 // pred_region
    _
  $region13: #{transformer_forward.10} parent=0 // pred_fallthru
    _
  // Predicated region
  $region14: #{transformer_forward.10} parent=0 // pred_check
    _
  $region15: #{transformer_forward.10} parent=0 // pred_check_branch
    %18 = sbr.rel (0) target = $region17
  $region16: #{transformer_forward.10} parent=0 // pred_region
    _
  $region17: #{transformer_forward.10} parent=0 // pred_fallthru
    _
  // Predicated region
  $region18: #{transformer_forward.10} parent=0 // pred_check
    _
  $region19: #{transformer_forward.10} parent=0 // pred_check_branch
    %20 = sbr.rel (0) target = $region21
  $region20: #{transformer_forward.10} parent=0 // pred_region
    _
  $region21: #{transformer_forward.10} parent=0 // pred_fallthru
    _
  // Predicated region
  $region22: #{transformer_forward.10} parent=0 // pred_check
    _
  $region23: #{transformer_forward.10} parent=0 // pred_check_branch
    %22 = sbr.rel (0) target = $region25
  $region24: #{transformer_forward.10} parent=0 // pred_region
    _
  $region25: #{transformer_forward.10} parent=0 // pred_fallthru
    _
  %v24 = vld [vmem:[%s0] sm:$0xff]
  %v25 = vld [vmem:[%s0 + $0x8] sm:$0xff]
  %vm26 = vcmask 523264
  %v27 = vsel %vm26, %v24, 0.0
  %28 = vadd.xlane.f32.xlu0 %v27
  %v29 = vpop.xlane.xlu0 %28
  %v30 = vsel %vm26, %v25, 0.0
  %31 = vadd.xlane.f32.xlu0 %v30
  %v32 = vpop.xlane.xlu0 %31
  %v33 = vrcp.pop 64.0
  %v34 = vmul.f32 %v29, %v33
  %v35 = vmul.f32 %v32, %v33
  %v36 = vsub.f32 %v24, %v34
  %v37 = vsub.f32 %v25, %v35
  %v38 = vmul.f32 %v36, %v36
  %v39 = vmul.f32 %v37, %v37
  %v40 = vsel %vm26, %v38, 0.0
  %41 = vadd.xlane.f32.xlu0 %v40
  %v42 = vpop.xlane.xlu0 %41
  %v43 = vsel %vm26, %v39, 0.0
  %44 = vadd.xlane.f32.xlu0 %v43
  %v45 = vpop.xlane.xlu0 %44
  %v46 = vmul.f32 %v42, %v33
  %v47 = vmul.f32 %v45, %v33
  %v48 = vadd.f32 %v46, 1e-05
  %v49 = vadd.f32 %v47, 1e-05
  %v50 = vrsqrt.pop %v48
  %v51 = vrsqrt.pop %v49
  %v52 = vmul.f32 %v36, %v50
  %v53 = vmul.f32 %v37, %v51
  %v54 = vld [vmem:[%s1] sm:$0x1]
  %v56 = vlaneseq
  %v57 = vshrl.u32 %v56, 7
  %v58 = vsub.s32 0, %v57
  %v59 = vrot.slane %v54, %v58
  %v61 = vmul.f32 %v52, %v59
  %v62 = vmul.f32 %v53, %v59
  %v63 = vld [vmem:[%s2] sm:$0x1]
  %v65 = vlaneseq
  %v66 = vshrl.u32 %v65, 7
  %v67 = vsub.s32 0, %v66
  %v68 = vrot.slane %v63, %v67
  %v70 = vadd.f32 %v61, %v68
  %v71 = vadd.f32 %v62, %v68
  %v72 = vpack.c.bf16 %v71, %v70
  %v73 = vld [vmem:[%s3] sm:$0xf]
  %v74 = vld [vmem:[%s3 + $0x4] sm:$0xf]
  %v75 = vld [vmem:[%s3 + $0x8] sm:$0xf]
  %v76 = vld [vmem:[%s3 + $0xc] sm:$0xf]
  %v77 = vld [vmem:[%s3 + $0x10] sm:$0xf]
  %v78 = vld [vmem:[%s3 + $0x14] sm:$0xf]
  %v79 = vld [vmem:[%s3 + $0x18] sm:$0xf]
  %v80 = vld [vmem:[%s3 + $0x1c] sm:$0xf]
  %v81 = vld [vmem:[%s4] sm:$0x1]
  %v83 = vlaneseq
  %v84 = vshrl.u32 %v83, 7
  %v85 = vsub.s32 0, %v84
  %v86 = vrot.slane %v81, %v85
  %v96 = vunpack.c.l.b16 %v73
  %v97 = vunpack.c.l.b16 %v74
  %v98 = vunpack.c.l.b16 %v75
  %v99 = vunpack.c.l.b16 %v76
  %v100 = vunpack.c.l.b16 %v77
  %v101 = vunpack.c.l.b16 %v78
  %v102 = vunpack.c.l.b16 %v79
  %v103 = vunpack.c.l.b16 %v80
  %v104 = vpack.c.b16 %v97, %v96
  %v105 = vpack.c.b16 %v99, %v98
  %v106 = vpack.c.b16 %v101, %v100
  %v107 = vpack.c.b16 %v103, %v102
  %v113 = vsel %vm26, %v72, 0
  %115 = vmatprep.subr.bf16.mxu0 0
  %116 = vmatpush1.bf16.msra.mxu0 0
  %117 = vmatprep.subr.bf16.mxu0 0
  %118 = vmatpush1.bf16.msra.mxu0 0
  %119 = vmatprep.subr.bf16.mxu0 0
  %120 = vmatpush1.bf16.msra.mxu0 0
  %121 = vmatprep.subr.bf16.mxu0 0
  %122 = vmatpush1.bf16.msra.mxu0 0
  %123 = vmatprep.subr.bf16.mxu0 0
  %124 = vmatpush1.bf16.msra.mxu0 %v107
  %125 = vmatprep.subr.bf16.mxu0 0
  %126 = vmatpush1.bf16.msra.mxu0 %v106
  %127 = vmatprep.subr.bf16.mxu0 0
  %128 = vmatpush1.bf16.msra.mxu0 %v105
  %129 = vmatprep.subr.bf16.mxu0 0
  %130 = vmatpush1.bf16.msra.mxu0 %v104
  %131 = vmatprep.subr.bf16.mxu0 0
  %132 = vmatpush2.bf16.msra.mxu0 0
  %133 = vmatprep.subr.bf16.mxu0 0
  %134 = vmatpush2.bf16.msra.mxu0 0
  %135 = vmatprep.subr.bf16.mxu0 0
  %136 = vmatpush2.bf16.msra.mxu0 0
  %137 = vmatprep.subr.bf16.mxu0 0
  %138 = vmatpush2.bf16.msra.mxu0 0
  %139 = vmatprep.subr.bf16.mxu0 0
  %140 = vmatpush2.bf16.msra.mxu0 0
  %141 = vmatprep.subr.bf16.mxu0 0
  %142 = vmatpush2.bf16.msra.mxu0 0
  %143 = vmatprep.subr.bf16.mxu0 0
  %144 = vmatpush2.bf16.msra.mxu0 0
  %145 = vmatprep.subr.bf16.mxu0 0
  %146 = vmatpush2.bf16.msra.mxu0 0
  %147 = vmatprep.mubr.bf16.mxu0 0
  %148 = vmatmul.mubr.bf16.gmra.mxu0 %v113
  %v149 = vpop.f32.mrf.mxu0
  %v150 = vadd.f32 %v86, %v149
  %v151 = vpop.f32.mrf.mxu0
  %v152 = vpop.f32.mrf.mxu0
  %v153 = vadd.f32 %v86, %v152
  %v154 = vpop.f32.mrf.mxu0
  %155 = vdwg.mxu0
  %v156 = vmul.f32 %v150, 0.5
  %v157 = vmul.f32 %v153, 0.5
  %v158 = vmul.f32 %v150, 0.044715
  %v159 = vmul.f32 %v153, 0.044715
  %v160 = vmul.f32 %v158, %v150
  %v161 = vmul.f32 %v159, %v153
  %v162 = vmul.f32 %v160, %v150
  %v163 = vmul.f32 %v161, %v153
  %v164 = vadd.f32 %v150, %v162
  %v165 = vadd.f32 %v153, %v163
  %v166 = vmul.f32 %v164, 0.7978846
  %v167 = vmul.f32 %v165, 0.7978846
  %v168 = vtanh.pop %v166
  %v169 = vtanh.pop %v167
  %v170 = vadd.f32 %v168, 1.0
  %v171 = vadd.f32 %v169, 1.0
  %v172 = vmul.f32 %v156, %v170
  %v173 = vmul.f32 %v157, %v171
  %v174 = vld [vmem:[%s5] sm:$0x1]
  %v176 = vlaneseq
  %v177 = vshrl.u32 %v176, 7
  %v178 = vsub.s32 0, %v177
  %v179 = vrot.slane %v174, %v178
  %v181 = vmul.f32 %v172, %v179
  %v182 = vmul.f32 %v173, %v179
  %183 = vst.msk [vmem:[%s6] sm:$0xff] %vm26, %v181
  %184 = vst.msk [vmem:[%s6 + $0x8] sm:$0xff] %vm26, %v182
  // Predicated region
  $region26: #{transformer_forward.10} parent=0 // pred_check
    _
  $region27: #{transformer_forward.10} parent=0 // pred_check_branch
    %186 = sbr.rel (0) target = $region29
  $region28: #{transformer_forward.10} parent=0 // pred_region
    _
  $region29: #{transformer_forward.10} parent=0 // pred_fallthru
    _
  // Predicated region
  $region30: #{transformer_forward.10} parent=0 // pred_check
    _
  $region31: #{transformer_forward.10} parent=0 // pred_check_branch
    %188 = sbr.rel (0) target = $region33
  $region32: #{transformer_forward.10} parent=0 // pred_region
    _
  $region33: #{transformer_forward.10} parent=0 // pred_fallthru
    _

// kernel: transformer_forward.11
$region0: #{transformer_forward.11}
  #allocation0 [shape = 'u32[]', space=smem, size = 0x4, offset = 0x4, fixed_abs, tag = 'smem constant byte address 0x4 - core index']
  #allocation1 [shape = 'u32[144,128]{1,0:T(1,128)}', space=vmem, size = 0x12000, scoped, tag = 'internal scratch']
  %s0 = inlined_call_operand.vmem [shape: f32[16,64], index: 0, kind: input, shape index: {}]
  %s1 = inlined_call_operand.vmem [shape: bf16[64,64], index: 1, kind: input, shape index: {}]
  %s2 = inlined_call_operand.vmem [shape: f32[1,64], index: 2, kind: input, shape index: {}]
  %s3 = inlined_call_operand.vmem [shape: f32[16,64], index: 3, kind: input, shape index: {}]
  %s4 = inlined_call_operand.vmem [shape: f32[16,64], index: 4, kind: output, shape index: {}]
  %s5 = sld [smem:[#allocation0]]
  $region26: #{transformer_forward.11} parent=0
    _
  %s7 = ssub.s32 1, %s5
  %s8 = scalar_select 0, %s7, %s5
  // Predicated region
  $region2: #{transformer_forward.11} parent=0 // pred_check
    _
  $region3: #{transformer_forward.11} parent=0 // pred_check_branch
    %10 = sbr.rel (0) target = $region5
  $region4: #{transformer_forward.11} parent=0 // pred_region
    _
  $region5: #{transformer_forward.11} parent=0 // pred_fallthru
    _
  // Predicated region
  $region6: #{transformer_forward.11} parent=0 // pred_check
    _
  $region7: #{transformer_forward.11} parent=0 // pred_check_branch
    %12 = sbr.rel (0) target = $region9
  $region8: #{transformer_forward.11} parent=0 // pred_region
    _
  $region9: #{transformer_forward.11} parent=0 // pred_fallthru
    _
  // Predicated region
  $region10: #{transformer_forward.11} parent=0 // pred_check
    _
  $region11: #{transformer_forward.11} parent=0 // pred_check_branch
    %14 = sbr.rel (0) target = $region13
  $region12: #{transformer_forward.11} parent=0 // pred_region
    _
  $region13: #{transformer_forward.11} parent=0 // pred_fallthru
    _
  // Predicated region
  $region14: #{transformer_forward.11} parent=0 // pred_check
    _
  $region15: #{transformer_forward.11} parent=0 // pred_check_branch
    %16 = sbr.rel (0) target = $region17
  $region16: #{transformer_forward.11} parent=0 // pred_region
    _
  $region17: #{transformer_forward.11} parent=0 // pred_fallthru
    _
  %v18 = vld [vmem:[%s0] sm:$0xff]
  %v19 = vld [vmem:[%s0 + $0x8] sm:$0xff]
  %v20 = vpack.c.bf16 %v19, %v18
  %v21 = vld [vmem:[%s1] sm:$0xf]
  %v22 = vld [vmem:[%s1 + $0x4] sm:$0xf]
  %v23 = vld [vmem:[%s1 + $0x8] sm:$0xf]
  %v24 = vld [vmem:[%s1 + $0xc] sm:$0xf]
  %v25 = vld [vmem:[%s1 + $0x10] sm:$0xf]
  %v26 = vld [vmem:[%s1 + $0x14] sm:$0xf]
  %v27 = vld [vmem:[%s1 + $0x18] sm:$0xf]
  %v28 = vld [vmem:[%s1 + $0x1c] sm:$0xf]
  %v29 = vld [vmem:[%s2] sm:$0x1]
  %v31 = vlaneseq
  %v32 = vshrl.u32 %v31, 7
  %v33 = vsub.s32 0, %v32
  %v34 = vrot.slane %v29, %v33
  %v44 = vunpack.c.l.b16 %v21
  %v45 = vunpack.c.l.b16 %v22
  %v46 = vunpack.c.l.b16 %v23
  %v47 = vunpack.c.l.b16 %v24
  %v48 = vunpack.c.l.b16 %v25
  %v49 = vunpack.c.l.b16 %v26
  %v50 = vunpack.c.l.b16 %v27
  %v51 = vunpack.c.l.b16 %v28
  %v52 = vpack.c.b16 %v45, %v44
  %v53 = vpack.c.b16 %v47, %v46
  %v54 = vpack.c.b16 %v49, %v48
  %v55 = vpack.c.b16 %v51, %v50
  %vm60 = vcmask 523264
  %v62 = vsel %vm60, %v20, 0
  %64 = vmatprep.subr.bf16.mxu0 0
  %65 = vmatpush1.bf16.msra.mxu0 0
  %66 = vmatprep.subr.bf16.mxu0 0
  %67 = vmatpush1.bf16.msra.mxu0 0
  %68 = vmatprep.subr.bf16.mxu0 0
  %69 = vmatpush1.bf16.msra.mxu0 0
  %70 = vmatprep.subr.bf16.mxu0 0
  %71 = vmatpush1.bf16.msra.mxu0 0
  %72 = vmatprep.subr.bf16.mxu0 0
  %73 = vmatpush1.bf16.msra.mxu0 %v55
  %74 = vmatprep.subr.bf16.mxu0 0
  %75 = vmatpush1.bf16.msra.mxu0 %v54
  %76 = vmatprep.subr.bf16.mxu0 0
  %77 = vmatpush1.bf16.msra.mxu0 %v53
  %78 = vmatprep.subr.bf16.mxu0 0
  %79 = vmatpush1.bf16.msra.mxu0 %v52
  %80 = vmatprep.subr.bf16.mxu0 0
  %81 = vmatpush2.bf16.msra.mxu0 0
  %82 = vmatprep.subr.bf16.mxu0 0
  %83 = vmatpush2.bf16.msra.mxu0 0
  %84 = vmatprep.subr.bf16.mxu0 0
  %85 = vmatpush2.bf16.msra.mxu0 0
  %86 = vmatprep.subr.bf16.mxu0 0
  %87 = vmatpush2.bf16.msra.mxu0 0
  %88 = vmatprep.subr.bf16.mxu0 0
  %89 = vmatpush2.bf16.msra.mxu0 0
  %90 = vmatprep.subr.bf16.mxu0 0
  %91 = vmatpush2.bf16.msra.mxu0 0
  %92 = vmatprep.subr.bf16.mxu0 0
  %93 = vmatpush2.bf16.msra.mxu0 0
  %94 = vmatprep.subr.bf16.mxu0 0
  %95 = vmatpush2.bf16.msra.mxu0 0
  %96 = vmatprep.mubr.bf16.mxu0 0
  %97 = vmatmul.mubr.bf16.gmra.mxu0 %v62
  %v98 = vpop.f32.mrf.mxu0
  %v99 = vadd.f32 %v34, %v98
  %v100 = vpop.f32.mrf.mxu0
  %v101 = vpop.f32.mrf.mxu0
  %v102 = vadd.f32 %v34, %v101
  %v103 = vpop.f32.mrf.mxu0
  %104 = vdwg.mxu0
  %v105 = vld [vmem:[%s3] sm:$0xff]
  %v106 = vld [vmem:[%s3 + $0x8] sm:$0xff]
  %v107 = vadd.f32 %v99, %v105
  %v108 = vadd.f32 %v102, %v106
  %109 = vst.msk [vmem:[%s4] sm:$0xff] %vm60, %v107
  %110 = vst.msk [vmem:[%s4 + $0x8] sm:$0xff] %vm60, %v108
  // Predicated region
  $region18: #{transformer_forward.11} parent=0 // pred_check
    _
  $region19: #{transformer_forward.11} parent=0 // pred_check_branch
    %112 = sbr.rel (0) target = $region21
  $region20: #{transformer_forward.11} parent=0 // pred_region
    _
  $region21: #{transformer_forward.11} parent=0 // pred_fallthru
    _
  // Predicated region
  $region22: #{transformer_forward.11} parent=0 // pred_check
    _
  $region23: #{transformer_forward.11} parent=0 // pred_check_branch
    %114 = sbr.rel (0) target = $region25
  $region24: #{transformer_forward.11} parent=0 // pred_region
    _
  $region25: #{transformer_forward.11} parent=0 // pred_fallthru
    _

// kernel: transformer_forward.8
$region0: #{transformer_forward.8}
  #allocation0 [shape = 'u32[]', space=smem, size = 0x4, offset = 0x4, fixed_abs, tag = 'smem constant byte address 0x4 - core index']
  #allocation1 [shape = 'u32[144,128]{1,0:T(1,128)}', space=vmem, size = 0x12000, scoped, tag = 'internal scratch']
  %s0 = inlined_call_operand.vmem [shape: f32[16,64], index: 0, kind: input, shape index: {}]
  %s1 = inlined_call_operand.vmem [shape: f32[1,64], index: 1, kind: input, shape index: {}]
  %s2 = inlined_call_operand.vmem [shape: f32[1,64], index: 2, kind: input, shape index: {}]
  %s3 = inlined_call_operand.vmem [shape: bf16[64,192], index: 3, kind: input, shape index: {}]
  %s4 = inlined_call_operand.vmem [shape: f32[1,192], index: 4, kind: input, shape index: {}]
  %s5 = inlined_call_operand.vmem [shape: f32[16,192], index: 5, kind: output, shape index: {}]
  %s6 = sld [smem:[#allocation0]]
  $region30: #{transformer_forward.8} parent=0
    _
  %s8 = ssub.s32 1, %s6
  %s9 = scalar_select 0, %s8, %s6
  // Predicated region
  $region2: #{transformer_forward.8} parent=0 // pred_check
    _
  $region3: #{transformer_forward.8} parent=0 // pred_check_branch
    %11 = sbr.rel (0) target = $region5
  $region4: #{transformer_forward.8} parent=0 // pred_region
    _
  $region5: #{transformer_forward.8} parent=0 // pred_fallthru
    _
  // Predicated region
  $region6: #{transformer_forward.8} parent=0 // pred_check
    _
  $region7: #{transformer_forward.8} parent=0 // pred_check_branch
    %13 = sbr.rel (0) target = $region9
  $region8: #{transformer_forward.8} parent=0 // pred_region
    _
  $region9: #{transformer_forward.8} parent=0 // pred_fallthru
    _
  // Predicated region
  $region10: #{transformer_forward.8} parent=0 // pred_check
    _
  $region11: #{transformer_forward.8} parent=0 // pred_check_branch
    %15 = sbr.rel (0) target = $region13
  $region12: #{transformer_forward.8} parent=0 // pred_region
    _
  $region13: #{transformer_forward.8} parent=0 // pred_fallthru
    _
  // Predicated region
  $region14: #{transformer_forward.8} parent=0 // pred_check
    _
  $region15: #{transformer_forward.8} parent=0 // pred_check_branch
    %17 = sbr.rel (0) target = $region17
  $region16: #{transformer_forward.8} parent=0 // pred_region
    _
  $region17: #{transformer_forward.8} parent=0 // pred_fallthru
    _
  // Predicated region
  $region18: #{transformer_forward.8} parent=0 // pred_check
    _
  $region19: #{transformer_forward.8} parent=0 // pred_check_branch
    %19 = sbr.rel (0) target = $region21
  $region20: #{transformer_forward.8} parent=0 // pred_region
    _
  $region21: #{transformer_forward.8} parent=0 // pred_fallthru
    _
  %v21 = vld [vmem:[%s0] sm:$0xff]
  %v22 = vld [vmem:[%s0 + $0x8] sm:$0xff]
  %vm23 = vcmask 523264
  %v24 = vsel %vm23, %v21, 0.0
  %25 = vadd.xlane.f32.xlu0 %v24
  %v26 = vpop.xlane.xlu0 %25
  %v27 = vsel %vm23, %v22, 0.0
  %28 = vadd.xlane.f32.xlu0 %v27
  %v29 = vpop.xlane.xlu0 %28
  %v30 = vrcp.pop 64.0
  %v31 = vmul.f32 %v26, %v30
  %v32 = vmul.f32 %v29, %v30
  %v33 = vsub.f32 %v21, %v31
  %v34 = vsub.f32 %v22, %v32
  %v35 = vmul.f32 %v33, %v33
  %v36 = vmul.f32 %v34, %v34
  %v37 = vsel %vm23, %v35, 0.0
  %38 = vadd.xlane.f32.xlu0 %v37
  %v39 = vpop.xlane.xlu0 %38
  %v40 = vsel %vm23, %v36, 0.0
  %41 = vadd.xlane.f32.xlu0 %v40
  %v42 = vpop.xlane.xlu0 %41
  %v43 = vmul.f32 %v39, %v30
  %v44 = vmul.f32 %v42, %v30
  %v45 = vadd.f32 %v43, 1e-05
  %v46 = vadd.f32 %v44, 1e-05
  %v47 = vrsqrt.pop %v45
  %v48 = vrsqrt.pop %v46
  %v49 = vmul.f32 %v33, %v47
  %v50 = vmul.f32 %v34, %v48
  %v51 = vld [vmem:[%s1] sm:$0x1]
  %v53 = vlaneseq
  %v54 = vshrl.u32 %v53, 7
  %v55 = vsub.s32 0, %v54
  %v56 = vrot.slane %v51, %v55
  %v58 = vmul.f32 %v49, %v56
  %v59 = vmul.f32 %v50, %v56
  %v60 = vld [vmem:[%s2] sm:$0x1]
  %v62 = vlaneseq
  %v63 = vshrl.u32 %v62, 7
  %v64 = vsub.s32 0, %v63
  %v65 = vrot.slane %v60, %v64
  %v67 = vadd.f32 %v58, %v65
  %v68 = vadd.f32 %v59, %v65
  %v69 = vpack.c.bf16 %v68, %v67
  %v70 = vld [vmem:[%s3] sm:$0xff]
  %v71 = vld [vmem:[%s3 + $0x8] sm:$0xff]
  %v72 = vld [vmem:[%s3 + $0x10] sm:$0xff]
  %v73 = vld [vmem:[%s3 + $0x18] sm:$0xff]
  %v74 = vld [vmem:[%s3 + $0x20] sm:$0xff]
  %v75 = vld [vmem:[%s3 + $0x28] sm:$0xff]
  %v76 = vld [vmem:[%s3 + $0x30] sm:$0xff]
  %v77 = vld [vmem:[%s3 + $0x38] sm:$0xff]
  %v86 = vunpack.c.l.b16 %v70
  %v87 = vunpack.c.h.b16 %v70
  %v88 = vunpack.c.l.b16 %v71
  %v89 = vunpack.c.h.b16 %v71
  %v90 = vunpack.c.l.b16 %v72
  %v91 = vunpack.c.h.b16 %v72
  %v92 = vunpack.c.l.b16 %v73
  %v93 = vunpack.c.h.b16 %v73
  %v94 = vunpack.c.l.b16 %v74
  %v95 = vunpack.c.h.b16 %v74
  %v96 = vunpack.c.l.b16 %v75
  %v97 = vunpack.c.h.b16 %v75
  %v98 = vunpack.c.l.b16 %v76
  %v99 = vunpack.c.h.b16 %v76
  %v100 = vunpack.c.l.b16 %v77
  %v101 = vunpack.c.h.b16 %v77
  %v102 = vpack.c.b16 %v88, %v86
  %v103 = vpack.c.b16 %v89, %v87
  %v104 = vpack.c.b16 %v92, %v90
  %v105 = vpack.c.b16 %v93, %v91
  %v106 = vpack.c.b16 %v96, %v94
  %v107 = vpack.c.b16 %v97, %v95
  %v108 = vpack.c.b16 %v100, %v98
  %v109 = vpack.c.b16 %v101, %v99
  %v119 = vsel %vm23, %v69, 0
  %121 = vmatprep.subr.bf16.mxu0 0
  %122 = vmatpush1.bf16.msra.mxu0 0
  %123 = vmatprep.subr.bf16.mxu0 0
  %124 = vmatpush1.bf16.msra.mxu0 0
  %125 = vmatprep.subr.bf16.mxu0 0
  %126 = vmatpush1.bf16.msra.mxu0 0
  %127 = vmatprep.subr.bf16.mxu0 0
  %128 = vmatpush1.bf16.msra.mxu0 0
  %129 = vmatprep.subr.bf16.mxu0 %v109
  %130 = vmatpush1.bf16.msra.mxu0 %v108
  %131 = vmatprep.subr.bf16.mxu0 %v107
  %132 = vmatpush1.bf16.msra.mxu0 %v106
  %133 = vmatprep.subr.bf16.mxu0 %v105
  %134 = vmatpush1.bf16.msra.mxu0 %v104
  %135 = vmatprep.subr.bf16.mxu0 %v103
  %136 = vmatpush1.bf16.msra.mxu0 %v102
  %137 = vmatprep.subr.bf16.mxu0 0
  %138 = vmatpush2.bf16.msra.mxu0 0
  %139 = vmatprep.subr.bf16.mxu0 0
  %140 = vmatpush2.bf16.msra.mxu0 0
  %141 = vmatprep.subr.bf16.mxu0 0
  %142 = vmatpush2.bf16.msra.mxu0 0
  %143 = vmatprep.subr.bf16.mxu0 0
  %144 = vmatpush2.bf16.msra.mxu0 0
  %145 = vmatprep.subr.bf16.mxu0 0
  %146 = vmatpush2.bf16.msra.mxu0 0
  %147 = vmatprep.subr.bf16.mxu0 0
  %148 = vmatpush2.bf16.msra.mxu0 0
  %149 = vmatprep.subr.bf16.mxu0 0
  %150 = vmatpush2.bf16.msra.mxu0 0
  %151 = vmatprep.subr.bf16.mxu0 0
  %152 = vmatpush2.bf16.msra.mxu0 0
  %153 = vmatprep.mubr.bf16.mxu0 0
  %154 = vmatmul.mubr.bf16.gmra.mxu0 %v119
  %v155 = vpop.f32.mrf.mxu0
  %v156 = vadd.f32 0.0, %v155
  %v157 = vpop.f32.mrf.mxu0
  %v158 = vadd.f32 0.0, %v157
  %v159 = vpop.f32.mrf.mxu0
  %v160 = vadd.f32 0.0, %v159
  %v161 = vpop.f32.mrf.mxu0
  %v162 = vadd.f32 0.0, %v161
  %163 = vdwg.mxu0
  %v164 = vld [vmem:[%s4] sm:$0x3]
  %v166 = vlaneseq
  %v167 = vshrl.u32 %v166, 7
  %v168 = vsub.s32 0, %v167
  %v169 = vrot.slane %v164, %v168
  %v170 = vlaneseq
  %v171 = vshrl.u32 %v170, 7
  %v172 = vsub.s32 1, %v171
  %v173 = vrot.slane %v164, %v172
  %v176 = vmul.f32 %v156, %v169
  %v177 = vmul.f32 %v158, %v173
  %v178 = vmul.f32 %v160, %v169
  %v179 = vmul.f32 %v162, %v173
  %180 = vst [vmem:[%s5] sm:$0xff] %v176
  %181 = vst.msk [vmem:[%s5 + $0x8] sm:$0xff] %vm23, %v177
  %182 = vst [vmem:[%s5 + $0x10] sm:$0xff] %v178
  %183 = vst.msk [vmem:[%s5 + $0x18] sm:$0xff] %vm23, %v179
  // Predicated region
  $region22: #{transformer_forward.8} parent=0 // pred_check
    _
  $region23: #{transformer_forward.8} parent=0 // pred_check_branch
    %185 = sbr.rel (0) target = $region25
  $region24: #{transformer_forward.8} parent=0 // pred_region
    _
  $region25: #{transformer_forward.8} parent=0 // pred_fallthru
    _
  // Predicated region
  $region26: #{transformer_forward.8} parent=0 // pred_check
    _
  $region27: #{transformer_forward.8} parent=0 // pred_check_branch
    %187 = sbr.rel (0) target = $region29
  $region28: #{transformer_forward.8} parent=0 // pred_region
    _
  $region29: #{transformer_forward.8} parent=0 // pred_fallthru
    _

// kernel: transformer_forward.9
$region0: #{transformer_forward.9}
  #allocation0 [shape = 'u32[]', space=smem, size = 0x4, offset = 0x4, fixed_abs, tag = 'smem constant byte address 0x4 - core index']
  #allocation1 [shape = 'u32[144,128]{1,0:T(1,128)}', space=vmem, size = 0x12000, scoped, tag = 'internal scratch']
  %s0 = inlined_call_operand.vmem [shape: f32[2,8,192], index: 0, kind: input, shape index: {}]
  %s1 = inlined_call_operand.vmem [shape: f32[2,8,64], index: 1, kind: input, shape index: {}]
  %s2 = inlined_call_operand.vmem [shape: bf16[64,64], index: 2, kind: input, shape index: {}]
  %s3 = inlined_call_operand.vmem [shape: f32[1,64], index: 3, kind: input, shape index: {}]
  %s4 = inlined_call_operand.vmem [shape: f32[2,8,64], index: 4, kind: output, shape index: {}]
  %s5 = sld [smem:[#allocation0]]
  $region49: #{transformer_forward.9} parent=0
    _
  %s7 = ssub.s32 1, %s5
  %s8 = scalar_select 0, %s7, %s5
  loop: start=0, step=1, limit=4
  $region2: #{transformer_forward.9} parent=0 // loop_pre_header
    _
  $region3: #{transformer_forward.9} parent=0 // loop_header
    %s10 = sphi 0, %s14
    %p11 = scmp.ge.s32.totalorder %s10, 4
    %s20 = sphi 0, %s22
    %s23 = sphi 0, %s20
    %s24 = sphi 0, %s23
    %s40 = sphi 0, %s24
    %s46 = sphi 0, %s48
    %s49 = sphi 0, %s46
    %s50 = sphi 0, %s49
    %s66 = sphi 0, %s50
    %s70 = sphi 0, %s70
    %s72 = sphi 0, %s70
    %s73 = sphi 0, %s72
    %s87 = sphi 0, %s73
    %s91 = sphi 0, %s91
    %s93 = sphi 0, %s91
    %s94 = sphi 0, %s93
    %s108 = sphi 0, %s94
    %s114 = sphi 0, %s116
    %s117 = sphi 0, %s114
    %s118 = sphi 0, %s117
    %s134 = sphi 0, %s118
  $region4: #{transformer_forward.9} parent=0 // loop_header_branch
    %13 = sbr.rel (%p11) target = $region8
  $region5: #{transformer_forward.9} parent=0 // loop_body
    %s15 = ssub.s32 %s10, 1
    %s16 = ssub.s32 %s10, 2
    %s17 = sadd.s32 %s10, 1
    %s18 = ssub.s32 %s10, %s17
    %p19 = scmp.eq.s32.totalorder %s18, 0
    %s21 = sadd.s32 %s20, 1
    %s22 = scalar_select %p19, %s20, %s21
    %p25 = pneg %p19
    %p26 = scmp.eq.s32.totalorder %s10, 1
    %p27 = por %p25, %p26
    %p28 = scmp.ne.s32.totalorder %s20, %s23
    %p29 = scmp.eq.s32.totalorder %s10, 0
    %p30 = por %p28, %p29
    %p31 = scmp.ne.s32.totalorder %s20, %s23
    %p32 = scmp.eq.s32.totalorder %s15, 1
    %p33 = por %p31, %p32
    %p34 = scmp.ne.s32.totalorder %s23, %s24
    %p35 = scmp.eq.s32.totalorder %s15, 0
    %p36 = por %p34, %p35
    %p37 = scmp.ne.s32.totalorder %s23, %s24
    %p38 = scmp.eq.s32.totalorder %s16, 1
    %p39 = por %p37, %p38
    %p41 = scmp.ne.s32.totalorder %s24, %s40
    %p42 = scmp.eq.s32.totalorder %s16, 0
    %p43 = por %p41, %p42
    %s44 = ssub.s32 %s10, %s17
    %p45 = scmp.eq.s32.totalorder %s44, 0
    %s47 = sadd.s32 %s46, 1
    %s48 = scalar_select %p45, %s46, %s47
    %p51 = pneg %p45
    %p52 = scmp.eq.s32.totalorder %s10, 1
    %p53 = por %p51, %p52
    %p54 = scmp.ne.s32.totalorder %s46, %s49
    %p55 = scmp.eq.s32.totalorder %s10, 0
    %p56 = por %p54, %p55
    %p57 = scmp.ne.s32.totalorder %s46, %s49
    %p58 = scmp.eq.s32.totalorder %s15, 1
    %p59 = por %p57, %p58
    %p60 = scmp.ne.s32.totalorder %s49, %s50
    %p61 = scmp.eq.s32.totalorder %s15, 0
    %p62 = por %p60, %p61
    %p63 = scmp.ne.s32.totalorder %s49, %s50
    %p64 = scmp.eq.s32.totalorder %s16, 1
    %p65 = por %p63, %p64
    %p67 = scmp.ne.s32.totalorder %s50, %s66
    %p68 = scmp.eq.s32.totalorder %s16, 0
    %p69 = por %p67, %p68
    %s71 = sadd.s32 %s70, 1
    %p74 = scmp.eq.s32.totalorder %s10, 1
    %p75 = scmp.ne.s32.totalorder %s70, %s72
    %p76 = scmp.eq.s32.totalorder %s10, 0
    %p77 = por %p75, %p76
    %p78 = scmp.ne.s32.totalorder %s70, %s72
    %p79 = scmp.eq.s32.totalorder %s15, 1
    %p80 = por %p78, %p79
    %p81 = scmp.ne.s32.totalorder %s72, %s73
    %p82 = scmp.eq.s32.totalorder %s15, 0
    %p83 = por %p81, %p82
    %p84 = scmp.ne.s32.totalorder %s72, %s73
    %p85 = scmp.eq.s32.totalorder %s16, 1
    %p86 = por %p84, %p85
    %p88 = scmp.ne.s32.totalorder %s73, %s87
    %p89 = scmp.eq.s32.totalorder %s16, 0
    %p90 = por %p88, %p89
    %s92 = sadd.s32 %s91, 1
    %p95 = scmp.eq.s32.totalorder %s10, 1
    %p96 = scmp.ne.s32.totalorder %s91, %s93
    %p97 = scmp.eq.s32.totalorder %s10, 0
    %p98 = por %p96, %p97
    %p99 = scmp.ne.s32.totalorder %s91, %s93
    %p100 = scmp.eq.s32.totalorder %s15, 1
    %p101 = por %p99, %p100
    %p102 = scmp.ne.s32.totalorder %s93, %s94
    %p103 = scmp.eq.s32.totalorder %s15, 0
    %p104 = por %p102, %p103
    %p105 = scmp.ne.s32.totalorder %s93, %s94
    %p106 = scmp.eq.s32.totalorder %s16, 1
    %p107 = por %p105, %p106
    %p109 = scmp.ne.s32.totalorder %s94, %s108
    %p110 = scmp.eq.s32.totalorder %s16, 0
    %p111 = por %p109, %p110
    %s112 = ssub.s32 %s10, %s17
    %p113 = scmp.eq.s32.totalorder %s112, 0
    %s115 = sadd.s32 %s114, 1
    %s116 = scalar_select %p113, %s114, %s115
    %p119 = pneg %p113
    %p120 = scmp.eq.s32.totalorder %s10, 1
    %p121 = por %p119, %p120
    %p122 = scmp.ne.s32.totalorder %s114, %s117
    %p123 = scmp.eq.s32.totalorder %s10, 0
    %p124 = por %p122, %p123
    %p125 = scmp.ne.s32.totalorder %s114, %s117
    %p126 = scmp.eq.s32.totalorder %s15, 1
    %p127 = por %p125, %p126
    %p128 = scmp.ne.s32.totalorder %s117, %s118
    %p129 = scmp.eq.s32.totalorder %s15, 0
    %p130 = por %p128, %p129
    %p131 = scmp.ne.s32.totalorder %s117, %s118
    %p132 = scmp.eq.s32.totalorder %s16, 1
    %p133 = por %p131, %p132
    %p135 = scmp.ne.s32.totalorder %s118, %s134
    %p136 = scmp.eq.s32.totalorder %s16, 0
    %p137 = por %p135, %p136
    %p138 = scmp.le.s32.totalorder 1, %s10
    %p139 = scmp.lt.s32.totalorder %s10, 3
    %p140 = pnand %p138, %p139
    %p141 = pneg %p140
    // Predicated region
    $region9: #{transformer_forward.9} parent=5 // pred_check
      _
    $region10: #{transformer_forward.9} parent=5 // pred_check_branch
      %143 = sbr.rel (%p140) target = $region12
    $region11: #{transformer_forward.9} parent=5 // pred_region
      %s144 = ssub.s32 %s10, 1
      // Predicated region
      $region13: #{transformer_forward.9} parent=11 // pred_check
        %p145 = pneg %p83
      $region14: #{transformer_forward.9} parent=11 // pred_check_branch
        %147 = sbr.rel (%p145) target = $region16
      $region15: #{transformer_forward.9} parent=11 // pred_region
        _
      $region16: #{transformer_forward.9} parent=11 // pred_fallthru
        _
      // Predicated region
      $region17: #{transformer_forward.9} parent=11 // pred_check
        %p148 = pneg %p104
      $region18: #{transformer_forward.9} parent=11 // pred_check_branch
        %150 = sbr.rel (%p148) target = $region20
      $region19: #{transformer_forward.9} parent=11 // pred_region
        _
      $region20: #{transformer_forward.9} parent=11 // pred_fallthru
        _
    $region12: #{transformer_forward.9} parent=5 // pred_fallthru
      _
    %p151 = scmp.lt.s32.totalorder %s10, 2
    // Predicated region
    $region21: #{transformer_forward.9} parent=5 // pred_check
      %p152 = pneg %p151
    $region22: #{transformer_forward.9} parent=5 // pred_check_branch
      %154 = sbr.rel (%p152) target = $region24
    $region23: #{transformer_forward.9} parent=5 // pred_region
      // Predicated region
      $region25: #{transformer_forward.9} parent=23 // pred_check
        %p155 = pneg %p30
      $region26: #{transformer_forward.9} parent=23 // pred_check_branch
        %157 = sbr.rel (%p155) target = $region28
      $region27: #{transformer_forward.9} parent=23 // pred_region
        %p158 = scmp.lt.s32.totalorder %s10, 1
        %s159 = scalar_select %p158, %s10, 1
        %s160 = smul.addr %s159, 2
        %s161 = smul.addr %s160, 8
        %s162 = scalar_lea.vmem %s0, %s161
      $region28: #{transformer_forward.9} parent=23 // pred_fallthru
        _
      // Predicated region
      $region29: #{transformer_forward.9} parent=23 // pred_check
        %p163 = pneg %p56
      $region30: #{transformer_forward.9} parent=23 // pred_check_branch
        %165 = sbr.rel (%p163) target = $region32
      $region31: #{transformer_forward.9} parent=23 // pred_region
        %p166 = scmp.lt.s32.totalorder %s10, 1
        %s167 = scalar_select %p166, %s10, 1
        %s168 = smul.addr %s167, 8
        %s169 = scalar_lea.vmem %s1, %s168
      $region32: #{transformer_forward.9} parent=23 // pred_fallthru
        _
    $region24: #{transformer_forward.9} parent=5 // pred_fallthru
      _
    %p170 = scmp.le.s32.totalorder 1, %s10
    %p171 = scmp.lt.s32.totalorder %s10, 3
    %p172 = pnand %p170, %p171
    %p173 = pneg %p172
    // Predicated region
    $region33: #{transformer_forward.9} parent=5 // pred_check
      _
    $region34: #{transformer_forward.9} parent=5 // pred_check_branch
      %175 = sbr.rel (%p172) target = $region36
    $region35: #{transformer_forward.9} parent=5 // pred_region
      %s176 = ssub.s32 %s10, 1
      %p177 = scmp.lt.s32.totalorder %s15, 1
      %s178 = scalar_select %p177, %s15, 1
      %s179 = smul.addr %s178, 2
      %s180 = smul.addr %s179, 8
      %s181 = scalar_lea.vmem %s0, %s180
      %p182 = pneg %p36
      %p183 = pneg %p33
      %p184 = scmp.lt.s32.totalorder %s15, 1
      %s185 = scalar_select %p184, %s15, 1
      %s186 = smul.addr %s185, 8
      %s187 = scalar_lea.vmem %s1, %s186
      %p188 = pneg %p62
      %p189 = pneg %p59
      %p190 = pneg %p83
      %p191 = pneg %p80
      %p192 = pneg %p104
      %p193 = pneg %p101
      %p194 = pneg %p130
      %p195 = pneg %p127
      %p196 = scmp.lt.s32.totalorder %s15, 1
      %s197 = scalar_select %p196, %s15, 1
      %s198 = smul.addr %s197, 8
      %s199 = scalar_lea.vmem %s4, %s198
      %p200 = scmp.lt.s32.totalorder %s15, 1
      %s201 = scalar_select %p200, %s15, 1
      %s202 = smul.addr %s201, 2
      %s203 = smul.addr %s202, 8
      %s204 = scalar_lea.vmem %s0, %s203
      %p205 = scmp.lt.s32.totalorder %s15, 1
      %s206 = scalar_select %p205, %s15, 1
      %s207 = smul.addr %s206, 8
      %s208 = scalar_lea.vmem %s1, %s207
      %p209 = scmp.lt.s32.totalorder %s15, 1
      %s210 = scalar_select %p209, %s15, 1
      %s211 = smul.addr %s210, 8
      %s212 = scalar_lea.vmem %s4, %s211
      %v214 = vld [vmem:[%s3] sm:$0x1]
      %v215 = vld [vmem:[%s208] sm:$0xff]
      %v217 = vlaneseq
      %v218 = vshrl.u32 %v217, 7
      %v219 = vsub.s32 0, %v218
      %v220 = vrot.slane %v214, %v219
      %v222 = vadd.f32 %v220, %v215
      %v223 = vld [vmem:[%s204] sm:$0xff]
      %v224 = vpack.c.bf16 %v223, %v223
      %v225 = vld [vmem:[%s204 + $0x8] sm:$0xff]
      %v226 = vpack.c.bf16 %v225, %v225
      %228 = vrot.lane.b32.xlu0 %v224, 64
      %v229 = vpop.permute.xlu0 %228
      %vm230 = vcmask 130048
      %v232 = vsel %vm230, %v224, 0
      %v235 = vsel %vm230, %v229, 0
      %237 = vmatprep.subr.bf16.mxu0 0
      %238 = vmatpush1.bf16.xpose.msra.mxu0 0
      %239 = vmatprep.subr.bf16.mxu0 0
      %240 = vmatpush1.bf16.xpose.msra.mxu0 0
      %241 = vmatprep.subr.bf16.mxu0 0
      %242 = vmatpush1.bf16.xpose.msra.mxu0 0
      %243 = vmatprep.subr.bf16.mxu0 0
      %244 = vmatpush1.bf16.xpose.msra.mxu0 0
      %245 = vmatprep.subr.bf16.mxu0 0
      %246 = vmatpush1.bf16.xpose.msra.mxu0 0
      %247 = vmatprep.subr.bf16.mxu0 0
      %248 = vmatpush1.bf16.xpose.msra.mxu0 0
      %249 = vmatprep.subr.bf16.mxu0 0
      %250 = vmatpush1.bf16.xpose.msra.mxu0 0
      %251 = vmatprep.subr.bf16.mxu0 0
      %252 = vmatpush1.bf16.xpose.msra.mxu0 %v235
      %253 = vmatprep.subr.bf16.mxu0 0
      %254 = vmatpush2.bf16.xpose.msra.mxu0 0
      %255 = vmatprep.subr.bf16.mxu0 0
      %256 = vmatpush2.bf16.xpose.msra.mxu0 0
      %257 = vmatprep.subr.bf16.mxu0 0
      %258 = vmatpush2.bf16.xpose.msra.mxu0 0
      %259 = vmatprep.subr.bf16.mxu0 0
      %260 = vmatpush2.bf16.xpose.msra.mxu0 0
      %261 = vmatprep.subr.bf16.mxu0 0
      %262 = vmatpush2.bf16.xpose.msra.mxu0 0
      %263 = vmatprep.subr.bf16.mxu0 0
      %264 = vmatpush2.bf16.xpose.msra.mxu0 0
      %265 = vmatprep.subr.bf16.mxu0 0
      %266 = vmatpush2.bf16.xpose.msra.mxu0 0
      %267 = vmatprep.subr.bf16.mxu0 0
      %268 = vmatpush2.bf16.xpose.msra.mxu0 0
      %269 = vmatprep.mubr.bf16.mxu0 0
      %270 = vmatmul.mubr.bf16.gmra.mxu0 %v232
      %v271 = vpop.f32.mrf.mxu0
      %v272 = vadd.f32 0.0, %v271
      %v273 = vpop.f32.mrf.mxu0
      %v274 = vpop.f32.mrf.mxu0
      %v275 = vpop.f32.mrf.mxu0
      %276 = vdwg.mxu0
      %vm277 = vcmask 64512
      %v278 = vsel %vm277, %v272, -inf
      %279 = vmax.xlane.f32.xlu0 %v278
      %v280 = vpop.xlane.xlu0 %279
      %v281 = vsub.f32 %v272, %v280
      %v282 = vmul.f32 %v281, 1.442695
      %v283 = vpow.pop %v282
      %v284 = vsel %vm277, %v283, 0.0
      %285 = vadd.xlane.f32.xlu0 %v284
      %v286 = vpop.xlane.xlu0 %285
      %v287 = vrcp.pop %v286
      %v288 = vmul.f32 %v283, %v287
      %v289 = vpack.c.bf16 %v288, %v288
      %v291 = vsel %vm277, %v289, 0
      %vm293 = vcmask 1043456
      %v295 = vsel %vm293, %v226, 0
      %297 = vmatprep.subr.bf16.mxu0 0
      %298 = vmatpush1.bf16.msra.mxu0 0
      %299 = vmatprep.subr.bf16.mxu0 0
      %300 = vmatpush1.bf16.msra.mxu0 0
      %301 = vmatprep.subr.bf16.mxu0 0
      %302 = vmatpush1.bf16.msra.mxu0 0
      %303 = vmatprep.subr.bf16.mxu0 0
      %304 = vmatpush1.bf16.msra.mxu0 0
      %305 = vmatprep.subr.bf16.mxu0 0
      %306 = vmatpush1.bf16.msra.mxu0 0
      %307 = vmatprep.subr.bf16.mxu0 0
      %308 = vmatpush1.bf16.msra.mxu0 0
      %309 = vmatprep.subr.bf16.mxu0 0
      %310 = vmatpush1.bf16.msra.mxu0 0
      %311 = vmatprep.subr.bf16.mxu0 0
      %312 = vmatpush1.bf16.msra.mxu0 %v295
      %313 = vmatprep.subr.bf16.mxu0 0
      %314 = vmatpush2.bf16.msra.mxu0 0
      %315 = vmatprep.subr.bf16.mxu0 0
      %316 = vmatpush2.bf16.msra.mxu0 0
      %317 = vmatprep.subr.bf16.mxu0 0
      %318 = vmatpush2.bf16.msra.mxu0 0
      %319 = vmatprep.subr.bf16.mxu0 0
      %320 = vmatpush2.bf16.msra.mxu0 0
      %321 = vmatprep.subr.bf16.mxu0 0
      %322 = vmatpush2.bf16.msra.mxu0 0
      %323 = vmatprep.subr.bf16.mxu0 0
      %324 = vmatpush2.bf16.msra.mxu0 0
      %325 = vmatprep.subr.bf16.mxu0 0
      %326 = vmatpush2.bf16.msra.mxu0 0
      %327 = vmatprep.subr.bf16.mxu0 0
      %328 = vmatpush2.bf16.msra.mxu0 0
      %329 = vmatprep.mubr.bf16.mxu0 0
      %330 = vmatmul.mubr.bf16.gmra.mxu0 %v291
      %v331 = vpop.f32.mrf.mxu0
      %v332 = vadd.f32 0.0, %v331
      %v333 = vpop.f32.mrf.mxu0
      %v334 = vpop.f32.mrf.mxu0
      %v335 = vpop.f32.mrf.mxu0
      %336 = vdwg.mxu0
      %v337 = vpack.c.bf16 %v332, %v332
      %v338 = vld [vmem:[%s2] sm:$0xf]
      %v339 = vld [vmem:[%s2 + $0x4] sm:$0xf]
      %v342 = vunpack.c.l.b16 %v338
      %v343 = vunpack.c.l.b16 %v339
      %v344 = vpack.c.b16 %v343, %v342
      %v347 = vsel %vm230, %v337, 0
      %349 = vmatprep.subr.bf16.mxu0 0
      %350 = vmatpush1.bf16.msra.mxu0 0
      %351 = vmatprep.subr.bf16.mxu0 0
      %352 = vmatpush1.bf16.msra.mxu0 0
      %353 = vmatprep.subr.bf16.mxu0 0
      %354 = vmatpush1.bf16.msra.mxu0 0
      %355 = vmatprep.subr.bf16.mxu0 0
      %356 = vmatpush1.bf16.msra.mxu0 0
      %357 = vmatprep.subr.bf16.mxu0 0
      %358 = vmatpush1.bf16.msra.mxu0 0
      %359 = vmatprep.subr.bf16.mxu0 0
      %360 = vmatpush1.bf16.msra.mxu0 0
      %361 = vmatprep.subr.bf16.mxu0 0
      %362 = vmatpush1.bf16.msra.mxu0 0
      %363 = vmatprep.subr.bf16.mxu0 0
      %364 = vmatpush1.bf16.msra.mxu0 %v344
      %365 = vmatprep.subr.bf16.mxu0 0
      %366 = vmatpush2.bf16.msra.mxu0 0
      %367 = vmatprep.subr.bf16.mxu0 0
      %368 = vmatpush2.bf16.msra.mxu0 0
      %369 = vmatprep.subr.bf16.mxu0 0
      %370 = vmatpush2.bf16.msra.mxu0 0
      %371 = vmatprep.subr.bf16.mxu0 0
      %372 = vmatpush2.bf16.msra.mxu0 0
      %373 = vmatprep.subr.bf16.mxu0 0
      %374 = vmatpush2.bf16.msra.mxu0 0
      %375 = vmatprep.subr.bf16.mxu0 0
      %376 = vmatpush2.bf16.msra.mxu0 0
      %377 = vmatprep.subr.bf16.mxu0 0
      %378 = vmatpush2.bf16.msra.mxu0 0
      %379 = vmatprep.subr.bf16.mxu0 0
      %380 = vmatpush2.bf16.msra.mxu0 0
      %381 = vmatprep.mubr.bf16.mxu0 0
      %382 = vmatmul.mubr.bf16.gmra.mxu0 %v347
      %v383 = vpop.f32.mrf.mxu0
      %v384 = vadd.f32 0.0, %v383
      %v385 = vpop.f32.mrf.mxu0
      %v386 = vpop.f32.mrf.mxu0
      %v387 = vpop.f32.mrf.mxu0
      %388 = vdwg.mxu0
      %v389 = vadd.f32 %v222, %v384
      %390 = vrot.lane.b32.xlu0 %v224, 112
      %v391 = vpop.permute.xlu0 %390
      %392 = vrot.lane.b32.xlu0 %v224, 48
      %v393 = vpop.permute.xlu0 %392
      %v395 = vsel %vm230, %v391, 0
      %v398 = vsel %vm230, %v393, 0
      %400 = vmatprep.subr.bf16.mxu0 0
      %401 = vmatpush1.bf16.xpose.msra.mxu0 0
      %402 = vmatprep.subr.bf16.mxu0 0
      %403 = vmatpush1.bf16.xpose.msra.mxu0 0
      %404 = vmatprep.subr.bf16.mxu0 0
      %405 = vmatpush1.bf16.xpose.msra.mxu0 0
      %406 = vmatprep.subr.bf16.mxu0 0
      %407 = vmatpush1.bf16.xpose.msra.mxu0 0
      %408 = vmatprep.subr.bf16.mxu0 0
      %409 = vmatpush1.bf16.xpose.msra.mxu0 0
      %410 = vmatprep.subr.bf16.mxu0 0
      %411 = vmatpush1.bf16.xpose.msra.mxu0 0
      %412 = vmatprep.subr.bf16.mxu0 0
      %413 = vmatpush1.bf16.xpose.msra.mxu0 0
      %414 = vmatprep.subr.bf16.mxu0 0
      %415 = vmatpush1.bf16.xpose.msra.mxu0 %v398
      %416 = vmatprep.subr.bf16.mxu0 0
      %417 = vmatpush2.bf16.xpose.msra.mxu0 0
      %418 = vmatprep.subr.bf16.mxu0 0
      %419 = vmatpush2.bf16.xpose.msra.mxu0 0
      %420 = vmatprep.subr.bf16.mxu0 0
      %421 = vmatpush2.bf16.xpose.msra.mxu0 0
      %422 = vmatprep.subr.bf16.mxu0 0
      %423 = vmatpush2.bf16.xpose.msra.mxu0 0
      %424 = vmatprep.subr.bf16.mxu0 0
      %425 = vmatpush2.bf16.xpose.msra.mxu0 0
      %426 = vmatprep.subr.bf16.mxu0 0
      %427 = vmatpush2.bf16.xpose.msra.mxu0 0
      %428 = vmatprep.subr.bf16.mxu0 0
      %429 = vmatpush2.bf16.xpose.msra.mxu0 0
      %430 = vmatprep.subr.bf16.mxu0 0
      %431 = vmatpush2.bf16.xpose.msra.mxu0 0
      %432 = vmatprep.mubr.bf16.mxu0 0
      %433 = vmatmul.mubr.bf16.gmra.mxu0 %v395
      %v434 = vpop.f32.mrf.mxu0
      %v435 = vadd.f32 0.0, %v434
      %v436 = vpop.f32.mrf.mxu0
      %v437 = vpop.f32.mrf.mxu0
      %v438 = vpop.f32.mrf.mxu0
      %439 = vdwg.mxu0
      %v440 = vsel %vm277, %v435, -inf
      %441 = vmax.xlane.f32.xlu0 %v440
      %v442 = vpop.xlane.xlu0 %441
      %v443 = vsub.f32 %v435, %v442
      %v444 = vmul.f32 %v443, 1.442695
      %v445 = vpow.pop %v444
      %v446 = vsel %vm277, %v445, 0.0
      %447 = vadd.xlane.f32.xlu0 %v446
      %v448 = vpop.xlane.xlu0 %447
      %v449 = vrcp.pop %v448
      %v450 = vmul.f32 %v445, %v449
      %v451 = vpack.c.bf16 %v450, %v450
      %453 = vrot.lane.b32.xlu0 %v226, 112
      %v454 = vpop.permute.xlu0 %453
      %v456 = vsel %vm277, %v451, 0
      %v459 = vsel %vm293, %v454, 0
      %461 = vmatprep.subr.bf16.mxu0 0
      %462 = vmatpush1.bf16.msra.mxu0 0
      %463 = vmatprep.subr.bf16.mxu0 0
      %464 = vmatpush1.bf16.msra.mxu0 0
      %465 = vmatprep.subr.bf16.mxu0 0
      %466 = vmatpush1.bf16.msra.mxu0 0
      %467 = vmatprep.subr.bf16.mxu0 0
      %468 = vmatpush1.bf16.msra.mxu0 0
      %469 = vmatprep.subr.bf16.mxu0 0
      %470 = vmatpush1.bf16.msra.mxu0 0
      %471 = vmatprep.subr.bf16.mxu0 0
      %472 = vmatpush1.bf16.msra.mxu0 0
      %473 = vmatprep.subr.bf16.mxu0 0
      %474 = vmatpush1.bf16.msra.mxu0 0
      %475 = vmatprep.subr.bf16.mxu0 0
      %476 = vmatpush1.bf16.msra.mxu0 %v459
      %477 = vmatprep.subr.bf16.mxu0 0
      %478 = vmatpush2.bf16.msra.mxu0 0
      %479 = vmatprep.subr.bf16.mxu0 0
      %480 = vmatpush2.bf16.msra.mxu0 0
      %481 = vmatprep.subr.bf16.mxu0 0
      %482 = vmatpush2.bf16.msra.mxu0 0
      %483 = vmatprep.subr.bf16.mxu0 0
      %484 = vmatpush2.bf16.msra.mxu0 0
      %485 = vmatprep.subr.bf16.mxu0 0
      %486 = vmatpush2.bf16.msra.mxu0 0
      %487 = vmatprep.subr.bf16.mxu0 0
      %488 = vmatpush2.bf16.msra.mxu0 0
      %489 = vmatprep.subr.bf16.mxu0 0
      %490 = vmatpush2.bf16.msra.mxu0 0
      %491 = vmatprep.subr.bf16.mxu0 0
      %492 = vmatpush2.bf16.msra.mxu0 0
      %493 = vmatprep.mubr.bf16.mxu0 0
      %494 = vmatmul.mubr.bf16.gmra.mxu0 %v456
      %v495 = vpop.f32.mrf.mxu0
      %v496 = vadd.f32 0.0, %v495
      %v497 = vpop.f32.mrf.mxu0
      %v498 = vpop.f32.mrf.mxu0
      %v499 = vpop.f32.mrf.mxu0
      %500 = vdwg.mxu0
      %v501 = vpack.c.bf16 %v496, %v496
      %v502 = vld [vmem:[%s2 + $0x8] sm:$0xf]
      %v503 = vld [vmem:[%s2 + $0xc] sm:$0xf]
      %v506 = vunpack.c.l.b16 %v502
      %v507 = vunpack.c.l.b16 %v503
      %v508 = vpack.c.b16 %v507, %v506
      %v511 = vsel %vm230, %v501, 0
      %513 = vmatprep.subr.bf16.mxu0 0
      %514 = vmatpush1.bf16.msra.mxu0 0
      %515 = vmatprep.subr.bf16.mxu0 0
      %516 = vmatpush1.bf16.msra.mxu0 0
      %517 = vmatprep.subr.bf16.mxu0 0
      %518 = vmatpush1.bf16.msra.mxu0 0
      %519 = vmatprep.subr.bf16.mxu0 0
      %520 = vmatpush1.bf16.msra.mxu0 0
      %521 = vmatprep.subr.bf16.mxu0 0
      %522 = vmatpush1.bf16.msra.mxu0 0
      %523 = vmatprep.subr.bf16.mxu0 0
      %524 = vmatpush1.bf16.msra.mxu0 0
      %525 = vmatprep.subr.bf16.mxu0 0
      %526 = vmatpush1.bf16.msra.mxu0 0
      %527 = vmatprep.subr.bf16.mxu0 0
      %528 = vmatpush1.bf16.msra.mxu0 %v508
      %529 = vmatprep.subr.bf16.mxu0 0
      %530 = vmatpush2.bf16.msra.mxu0 0
      %531 = vmatprep.subr.bf16.mxu0 0
      %532 = vmatpush2.bf16.msra.mxu0 0
      %533 = vmatprep.subr.bf16.mxu0 0
      %534 = vmatpush2.bf16.msra.mxu0 0
      %535 = vmatprep.subr.bf16.mxu0 0
      %536 = vmatpush2.bf16.msra.mxu0 0
      %537 = vmatprep.subr.bf16.mxu0 0
      %538 = vmatpush2.bf16.msra.mxu0 0
      %539 = vmatprep.subr.bf16.mxu0 0
      %540 = vmatpush2.bf16.msra.mxu0 0
      %541 = vmatprep.subr.bf16.mxu0 0
      %542 = vmatpush2.bf16.msra.mxu0 0
      %543 = vmatprep.subr.bf16.mxu0 0
      %544 = vmatpush2.bf16.msra.mxu0 0
      %545 = vmatprep.mubr.bf16.mxu0 0
      %546 = vmatmul.mubr.bf16.gmra.mxu0 %v511
      %v547 = vpop.f32.mrf.mxu0
      %v548 = vadd.f32 0.0, %v547
      %v549 = vpop.f32.mrf.mxu0
      %v550 = vpop.f32.mrf.mxu0
      %v551 = vpop.f32.mrf.mxu0
      %552 = vdwg.mxu0
      %v553 = vadd.f32 %v389, %v548
      %554 = vrot.lane.b32.xlu0 %v224, 96
      %v555 = vpop.permute.xlu0 %554
      %556 = vrot.lane.b32.xlu0 %v224, 32
      %v557 = vpop.permute.xlu0 %556
      %v559 = vsel %vm230, %v555, 0
      %v562 = vsel %vm230, %v557, 0
      %564 = vmatprep.subr.bf16.mxu0 0
      %565 = vmatpush1.bf16.xpose.msra.mxu0 0
      %566 = vmatprep.subr.bf16.mxu0 0
      %567 = vmatpush1.bf16.xpose.msra.mxu0 0
      %568 = vmatprep.subr.bf16.mxu0 0
      %569 = vmatpush1.bf16.xpose.msra.mxu0 0
      %570 = vmatprep.subr.bf16.mxu0 0
      %571 = vmatpush1.bf16.xpose.msra.mxu0 0
      %572 = vmatprep.subr.bf16.mxu0 0
      %573 = vmatpush1.bf16.xpose.msra.mxu0 0
      %574 = vmatprep.subr.bf16.mxu0 0
      %575 = vmatpush1.bf16.xpose.msra.mxu0 0
      %576 = vmatprep.subr.bf16.mxu0 0
      %577 = vmatpush1.bf16.xpose.msra.mxu0 0
      %578 = vmatprep.subr.bf16.mxu0 0
      %579 = vmatpush1.bf16.xpose.msra.mxu0 %v562
      %580 = vmatprep.subr.bf16.mxu0 0
      %581 = vmatpush2.bf16.xpose.msra.mxu0 0
      %582 = vmatprep.subr.bf16.mxu0 0
      %583 = vmatpush2.bf16.xpose.msra.mxu0 0
      %584 = vmatprep.subr.bf16.mxu0 0
      %585 = vmatpush2.bf16.xpose.msra.mxu0 0
      %586 = vmatprep.subr.bf16.mxu0 0
      %587 = vmatpush2.bf16.xpose.msra.mxu0 0
      %588 = vmatprep.subr.bf16.mxu0 0
      %589 = vmatpush2.bf16.xpose.msra.mxu0 0
      %590 = vmatprep.subr.bf16.mxu0 0
      %591 = vmatpush2.bf16.xpose.msra.mxu0 0
      %592 = vmatprep.subr.bf16.mxu0 0
      %593 = vmatpush2.bf16.xpose.msra.mxu0 0
      %594 = vmatprep.subr.bf16.mxu0 0
      %595 = vmatpush2.bf16.xpose.msra.mxu0 0
      %596 = vmatprep.mubr.bf16.mxu0 0
      %597 = vmatmul.mubr.bf16.gmra.mxu0 %v559
      %v598 = vpop.f32.mrf.mxu0
      %v599 = vadd.f32 0.0, %v598
      %v600 = vpop.f32.mrf.mxu0
      %v601 = vpop.f32.mrf.mxu0
      %v602 = vpop.f32.mrf.mxu0
      %603 = vdwg.mxu0
      %v604 = vsel %vm277, %v599, -inf
      %605 = vmax.xlane.f32.xlu0 %v604
      %v606 = vpop.xlane.xlu0 %605
      %v607 = vsub.f32 %v599, %v606
      %v608 = vmul.f32 %v607, 1.442695
      %v609 = vpow.pop %v608
      %v610 = vsel %vm277, %v609, 0.0
      %611 = vadd.xlane.f32.xlu0 %v610
      %v612 = vpop.xlane.xlu0 %611
      %v613 = vrcp.pop %v612
      %v614 = vmul.f32 %v609, %v613
      %v615 = vpack.c.bf16 %v614, %v614
      %616 = vrot.lane.b32.xlu0 %v226, 96
      %v617 = vpop.permute.xlu0 %616
      %v619 = vsel %vm277, %v615, 0
      %v622 = vsel %vm293, %v617, 0
      %624 = vmatprep.subr.bf16.mxu0 0
      %625 = vmatpush1.bf16.msra.mxu0 0
      %626 = vmatprep.subr.bf16.mxu0 0
      %627 = vmatpush1.bf16.msra.mxu0 0
      %628 = vmatprep.subr.bf16.mxu0 0
      %629 = vmatpush1.bf16.msra.mxu0 0
      %630 = vmatprep.subr.bf16.mxu0 0
      %631 = vmatpush1.bf16.msra.mxu0 0
      %632 = vmatprep.subr.bf16.mxu0 0
      %633 = vmatpush1.bf16.msra.mxu0 0
      %634 = vmatprep.subr.bf16.mxu0 0
      %635 = vmatpush1.bf16.msra.mxu0 0
      %636 = vmatprep.subr.bf16.mxu0 0
      %637 = vmatpush1.bf16.msra.mxu0 0
      %638 = vmatprep.subr.bf16.mxu0 0
      %639 = vmatpush1.bf16.msra.mxu0 %v622
      %640 = vmatprep.subr.bf16.mxu0 0
      %641 = vmatpush2.bf16.msra.mxu0 0
      %642 = vmatprep.subr.bf16.mxu0 0
      %643 = vmatpush2.bf16.msra.mxu0 0
      %644 = vmatprep.subr.bf16.mxu0 0
      %645 = vmatpush2.bf16.msra.mxu0 0
      %646 = vmatprep.subr.bf16.mxu0 0
      %647 = vmatpush2.bf16.msra.mxu0 0
      %648 = vmatprep.subr.bf16.mxu0 0
      %649 = vmatpush2.bf16.msra.mxu0 0
      %650 = vmatprep.subr.bf16.mxu0 0
      %651 = vmatpush2.bf16.msra.mxu0 0
      %652 = vmatprep.subr.bf16.mxu0 0
      %653 = vmatpush2.bf16.msra.mxu0 0
      %654 = vmatprep.subr.bf16.mxu0 0
      %655 = vmatpush2.bf16.msra.mxu0 0
      %656 = vmatprep.mubr.bf16.mxu0 0
      %657 = vmatmul.mubr.bf16.gmra.mxu0 %v619
      %v658 = vpop.f32.mrf.mxu0
      %v659 = vadd.f32 0.0, %v658
      %v660 = vpop.f32.mrf.mxu0
      %v661 = vpop.f32.mrf.mxu0
      %v662 = vpop.f32.mrf.mxu0
      %663 = vdwg.mxu0
      %v664 = vpack.c.bf16 %v659, %v659
      %v665 = vld [vmem:[%s2 + $0x10] sm:$0xf]
      %v666 = vld [vmem:[%s2 + $0x14] sm:$0xf]
      %v669 = vunpack.c.l.b16 %v665
      %v670 = vunpack.c.l.b16 %v666
      %v671 = vpack.c.b16 %v670, %v669
      %v674 = vsel %vm230, %v664, 0
      %676 = vmatprep.subr.bf16.mxu0 0
      %677 = vmatpush1.bf16.msra.mxu0 0
      %678 = vmatprep.subr.bf16.mxu0 0
      %679 = vmatpush1.bf16.msra.mxu0 0
      %680 = vmatprep.subr.bf16.mxu0 0
      %681 = vmatpush1.bf16.msra.mxu0 0
      %682 = vmatprep.subr.bf16.mxu0 0
      %683 = vmatpush1.bf16.msra.mxu0 0
      %684 = vmatprep.subr.bf16.mxu0 0
      %685 = vmatpush1.bf16.msra.mxu0 0
      %686 = vmatprep.subr.bf16.mxu0 0
      %687 = vmatpush1.bf16.msra.mxu0 0
      %688 = vmatprep.subr.bf16.mxu0 0
      %689 = vmatpush1.bf16.msra.mxu0 0
      %690 = vmatprep.subr.bf16.mxu0 0
      %691 = vmatpush1.bf16.msra.mxu0 %v671
      %692 = vmatprep.subr.bf16.mxu0 0
      %693 = vmatpush2.bf16.msra.mxu0 0
      %694 = vmatprep.subr.bf16.mxu0 0
      %695 = vmatpush2.bf16.msra.mxu0 0
      %696 = vmatprep.subr.bf16.mxu0 0
      %697 = vmatpush2.bf16.msra.mxu0 0
      %698 = vmatprep.subr.bf16.mxu0 0
      %699 = vmatpush2.bf16.msra.mxu0 0
      %700 = vmatprep.subr.bf16.mxu0 0
      %701 = vmatpush2.bf16.msra.mxu0 0
      %702 = vmatprep.subr.bf16.mxu0 0
      %703 = vmatpush2.bf16.msra.mxu0 0
      %704 = vmatprep.subr.bf16.mxu0 0
      %705 = vmatpush2.bf16.msra.mxu0 0
      %706 = vmatprep.subr.bf16.mxu0 0
      %707 = vmatpush2.bf16.msra.mxu0 0
      %708 = vmatprep.mubr.bf16.mxu0 0
      %709 = vmatmul.mubr.bf16.gmra.mxu0 %v674
      %v710 = vpop.f32.mrf.mxu0
      %v711 = vadd.f32 0.0, %v710
      %v712 = vpop.f32.mrf.mxu0
      %v713 = vpop.f32.mrf.mxu0
      %v714 = vpop.f32.mrf.mxu0
      %715 = vdwg.mxu0
      %v716 = vadd.f32 %v553, %v711
      %717 = vrot.lane.b32.xlu0 %v224, 80
      %v718 = vpop.permute.xlu0 %717
      %719 = vrot.lane.b32.xlu0 %v224, 16
      %v720 = vpop.permute.xlu0 %719
      %v722 = vsel %vm230, %v718, 0
      %v725 = vsel %vm230, %v720, 0
      %727 = vmatprep.subr.bf16.mxu0 0
      %728 = vmatpush1.bf16.xpose.msra.mxu0 0
      %729 = vmatprep.subr.bf16.mxu0 0
      %730 = vmatpush1.bf16.xpose.msra.mxu0 0
      %731 = vmatprep.subr.bf16.mxu0 0
      %732 = vmatpush1.bf16.xpose.msra.mxu0 0
      %733 = vmatprep.subr.bf16.mxu0 0
      %734 = vmatpush1.bf16.xpose.msra.mxu0 0
      %735 = vmatprep.subr.bf16.mxu0 0
      %736 = vmatpush1.bf16.xpose.msra.mxu0 0
      %737 = vmatprep.subr.bf16.mxu0 0
      %738 = vmatpush1.bf16.xpose.msra.mxu0 0
      %739 = vmatprep.subr.bf16.mxu0 0
      %740 = vmatpush1.bf16.xpose.msra.mxu0 0
      %741 = vmatprep.subr.bf16.mxu0 0
      %742 = vmatpush1.bf16.xpose.msra.mxu0 %v725
      %743 = vmatprep.subr.bf16.mxu0 0
      %744 = vmatpush2.bf16.xpose.msra.mxu0 0
      %745 = vmatprep.subr.bf16.mxu0 0
      %746 = vmatpush2.bf16.xpose.msra.mxu0 0
      %747 = vmatprep.subr.bf16.mxu0 0
      %748 = vmatpush2.bf16.xpose.msra.mxu0 0
      %749 = vmatprep.subr.bf16.mxu0 0
      %750 = vmatpush2.bf16.xpose.msra.mxu0 0
      %751 = vmatprep.subr.bf16.mxu0 0
      %752 = vmatpush2.bf16.xpose.msra.mxu0 0
      %753 = vmatprep.subr.bf16.mxu0 0
      %754 = vmatpush2.bf16.xpose.msra.mxu0 0
      %755 = vmatprep.subr.bf16.mxu0 0
      %756 = vmatpush2.bf16.xpose.msra.mxu0 0
      %757 = vmatprep.subr.bf16.mxu0 0
      %758 = vmatpush2.bf16.xpose.msra.mxu0 0
      %759 = vmatprep.mubr.bf16.mxu0 0
      %760 = vmatmul.mubr.bf16.gmra.mxu0 %v722
      %v761 = vpop.f32.mrf.mxu0
      %v762 = vadd.f32 0.0, %v761
      %v763 = vpop.f32.mrf.mxu0
      %v764 = vpop.f32.mrf.mxu0
      %v765 = vpop.f32.mrf.mxu0
      %766 = vdwg.mxu0
      %v767 = vsel %vm277, %v762, -inf
      %768 = vmax.xlane.f32.xlu0 %v767
      %v769 = vpop.xlane.xlu0 %768
      %v770 = vsub.f32 %v762, %v769
      %v771 = vmul.f32 %v770, 1.442695
      %v772 = vpow.pop %v771
      %v773 = vsel %vm277, %v772, 0.0
      %774 = vadd.xlane.f32.xlu0 %v773
      %v775 = vpop.xlane.xlu0 %774
      %v776 = vrcp.pop %v775
      %v777 = vmul.f32 %v772, %v776
      %v778 = vpack.c.bf16 %v777, %v777
      %779 = vrot.lane.b32.xlu0 %v226, 80
      %v780 = vpop.permute.xlu0 %779
      %v782 = vsel %vm277, %v778, 0
      %v785 = vsel %vm293, %v780, 0
      %787 = vmatprep.subr.bf16.mxu0 0
      %788 = vmatpush1.bf16.msra.mxu0 0
      %789 = vmatprep.subr.bf16.mxu0 0
      %790 = vmatpush1.bf16.msra.mxu0 0
      %791 = vmatprep.subr.bf16.mxu0 0
      %792 = vmatpush1.bf16.msra.mxu0 0
      %793 = vmatprep.subr.bf16.mxu0 0
      %794 = vmatpush1.bf16.msra.mxu0 0
      %795 = vmatprep.subr.bf16.mxu0 0
      %796 = vmatpush1.bf16.msra.mxu0 0
      %797 = vmatprep.subr.bf16.mxu0 0
      %798 = vmatpush1.bf16.msra.mxu0 0
      %799 = vmatprep.subr.bf16.mxu0 0
      %800 = vmatpush1.bf16.msra.mxu0 0
      %801 = vmatprep.subr.bf16.mxu0 0
      %802 = vmatpush1.bf16.msra.mxu0 %v785
      %803 = vmatprep.subr.bf16.mxu0 0
      %804 = vmatpush2.bf16.msra.mxu0 0
      %805 = vmatprep.subr.bf16.mxu0 0
      %806 = vmatpush2.bf16.msra.mxu0 0
      %807 = vmatprep.subr.bf16.mxu0 0
      %808 = vmatpush2.bf16.msra.mxu0 0
      %809 = vmatprep.subr.bf16.mxu0 0
      %810 = vmatpush2.bf16.msra.mxu0 0
      %811 = vmatprep.subr.bf16.mxu0 0
      %812 = vmatpush2.bf16.msra.mxu0 0
      %813 = vmatprep.subr.bf16.mxu0 0
      %814 = vmatpush2.bf16.msra.mxu0 0
      %815 = vmatprep.subr.bf16.mxu0 0
      %816 = vmatpush2.bf16.msra.mxu0 0
      %817 = vmatprep.subr.bf16.mxu0 0
      %818 = vmatpush2.bf16.msra.mxu0 0
      %819 = vmatprep.mubr.bf16.mxu0 0
      %820 = vmatmul.mubr.bf16.gmra.mxu0 %v782
      %v821 = vpop.f32.mrf.mxu0
      %v822 = vadd.f32 0.0, %v821
      %v823 = vpop.f32.mrf.mxu0
      %v824 = vpop.f32.mrf.mxu0
      %v825 = vpop.f32.mrf.mxu0
      %826 = vdwg.mxu0
      %v827 = vpack.c.bf16 %v822, %v822
      %v828 = vld [vmem:[%s2 + $0x18] sm:$0xf]
      %v829 = vld [vmem:[%s2 + $0x1c] sm:$0xf]
      %v832 = vunpack.c.l.b16 %v828
      %v833 = vunpack.c.l.b16 %v829
      %v834 = vpack.c.b16 %v833, %v832
      %v837 = vsel %vm230, %v827, 0
      %839 = vmatprep.subr.bf16.mxu0 0
      %840 = vmatpush1.bf16.msra.mxu0 0
      %841 = vmatprep.subr.bf16.mxu0 0
      %842 = vmatpush1.bf16.msra.mxu0 0
      %843 = vmatprep.subr.bf16.mxu0 0
      %844 = vmatpush1.bf16.msra.mxu0 0
      %845 = vmatprep.subr.bf16.mxu0 0
      %846 = vmatpush1.bf16.msra.mxu0 0
      %847 = vmatprep.subr.bf16.mxu0 0
      %848 = vmatpush1.bf16.msra.mxu0 0
      %849 = vmatprep.subr.bf16.mxu0 0
      %850 = vmatpush1.bf16.msra.mxu0 0
      %851 = vmatprep.subr.bf16.mxu0 0
      %852 = vmatpush1.bf16.msra.mxu0 0
      %853 = vmatprep.subr.bf16.mxu0 0
      %854 = vmatpush1.bf16.msra.mxu0 %v834
      %855 = vmatprep.subr.bf16.mxu0 0
      %856 = vmatpush2.bf16.msra.mxu0 0
      %857 = vmatprep.subr.bf16.mxu0 0
      %858 = vmatpush2.bf16.msra.mxu0 0
      %859 = vmatprep.subr.bf16.mxu0 0
      %860 = vmatpush2.bf16.msra.mxu0 0
      %861 = vmatprep.subr.bf16.mxu0 0
      %862 = vmatpush2.bf16.msra.mxu0 0
      %863 = vmatprep.subr.bf16.mxu0 0
      %864 = vmatpush2.bf16.msra.mxu0 0
      %865 = vmatprep.subr.bf16.mxu0 0
      %866 = vmatpush2.bf16.msra.mxu0 0
      %867 = vmatprep.subr.bf16.mxu0 0
      %868 = vmatpush2.bf16.msra.mxu0 0
      %869 = vmatprep.subr.bf16.mxu0 0
      %870 = vmatpush2.bf16.msra.mxu0 0
      %871 = vmatprep.mubr.bf16.mxu0 0
      %872 = vmatmul.mubr.bf16.gmra.mxu0 %v837
      %v873 = vpop.f32.mrf.mxu0
      %v874 = vadd.f32 0.0, %v873
      %v875 = vpop.f32.mrf.mxu0
      %v876 = vpop.f32.mrf.mxu0
      %v877 = vpop.f32.mrf.mxu0
      %878 = vdwg.mxu0
      %v879 = vadd.f32 %v716, %v874
      %vm880 = vcmask 523264
      %881 = vst.msk [vmem:[%s212] sm:$0xff] %vm880, %v879
      %p882 = scmp.lt.s32.totalorder %s15, 1
      %s883 = scalar_select %p882, %s15, 1
      %s884 = smul.addr %s883, 8
      %s885 = scalar_lea.vmem %s4, %s884
      // Predicated region
      $region37: #{transformer_forward.9} parent=35 // pred_check
        %p886 = pneg %p127
      $region38: #{transformer_forward.9} parent=35 // pred_check_branch
        %888 = sbr.rel (%p886) target = $region40
      $region39: #{transformer_forward.9} parent=35 // pred_region
        _
      $region40: #{transformer_forward.9} parent=35 // pred_fallthru
        _
    $region36: #{transformer_forward.9} parent=5 // pred_fallthru
      _
    %p889 = scmp.le.s32.totalorder 2, %s10
    // Predicated region
    $region41: #{transformer_forward.9} parent=5 // pred_check
      %p890 = pneg %p889
    $region42: #{transformer_forward.9} parent=5 // pred_check_branch
      %892 = sbr.rel (%p890) target = $region44
    $region43: #{transformer_forward.9} parent=5 // pred_region
      %s893 = ssub.s32 %s10, 2
      // Predicated region
      $region45: #{transformer_forward.9} parent=43 // pred_check
        %p894 = pneg %p133
      $region46: #{transformer_forward.9} parent=43 // pred_check_branch
        %896 = sbr.rel (%p894) target = $region48
      $region47: #{transformer_forward.9} parent=43 // pred_region
        %p897 = scmp.lt.s32.totalorder %s16, 1
        %s898 = scalar_select %p897, %s16, 1
        %s899 = smul.addr %s898, 8
        %s900 = scalar_lea.vmem %s4, %s899
      $region48: #{transformer_forward.9} parent=43 // pred_fallthru
        _
    $region44: #{transformer_forward.9} parent=5 // pred_fallthru
      _
  $region6: #{transformer_forward.9} parent=0 // loop_footer
    %s14 = sadd.s32 1, %s10
  $region7: #{transformer_forward.9} parent=0 // loop_footer_branch
    %9 = sbr.rel target = $region3
  $region8: #{transformer_forward.9} parent=0 // loop_exit
    _

// kernel: transformer_forward.15
$region0: #{transformer_forward.15}
  #allocation0 [shape = 'u32[]', space=smem, size = 0x4, offset = 0x4, fixed_abs, tag = 'smem constant byte address 0x4 - core index']
  #allocation1 [shape = 'u32[144,128]{1,0:T(1,128)}', space=vmem, size = 0x12000, scoped, tag = 'internal scratch']
  %s0 = inlined_call_operand.vmem [shape: f32[16,64], index: 0, kind: input, shape index: {}]
  %s1 = inlined_call_operand.vmem [shape: bf16[64,64], index: 1, kind: input, shape index: {}]
  %s2 = inlined_call_operand.vmem [shape: f32[1,64], index: 2, kind: input, shape index: {}]
  %s3 = inlined_call_operand.vmem [shape: f32[16,64], index: 3, kind: input, shape index: {}]
  %s4 = inlined_call_operand.hbm [shape: f32[16,64], index: 4, kind: output, shape index: {}]
  %s5 = sld [smem:[#allocation0]]
  $region26: #{transformer_forward.15} parent=0
    _
  %s7 = ssub.s32 1, %s5
  %s8 = scalar_select 0, %s7, %s5
  $region1: #{transformer_forward.15} parent=0
    #allocation2 [shape = 'u8[8192]{0}', space=vmem, size = 0x2000, scoped, tag = 'output window, operand 0, single buffered']
    #allocation3 [shape = 's32[1]{0}', space=sflag, size = 0x4, scoped, tag = 'scoped memory for transformer_forward.15']
    %9 = vsyncpa [#allocation3], 0
    // Predicated region
    $region2: #{transformer_forward.15} parent=1 // pred_check
      _
    $region3: #{transformer_forward.15} parent=1 // pred_check_branch
      %11 = sbr.rel (0) target = $region5
    $region4: #{transformer_forward.15} parent=1 // pred_region
      _
    $region5: #{transformer_forward.15} parent=1 // pred_fallthru
      _
    // Predicated region
    $region6: #{transformer_forward.15} parent=1 // pred_check
      _
    $region7: #{transformer_forward.15} parent=1 // pred_check_branch
      %13 = sbr.rel (0) target = $region9
    $region8: #{transformer_forward.15} parent=1 // pred_region
      _
    $region9: #{transformer_forward.15} parent=1 // pred_fallthru
      _
    // Predicated region
    $region10: #{transformer_forward.15} parent=1 // pred_check
      _
    $region11: #{transformer_forward.15} parent=1 // pred_check_branch
      %15 = sbr.rel (0) target = $region13
    $region12: #{transformer_forward.15} parent=1 // pred_region
      _
    $region13: #{transformer_forward.15} parent=1 // pred_fallthru
      _
    // Predicated region
    $region14: #{transformer_forward.15} parent=1 // pred_check
      _
    $region15: #{transformer_forward.15} parent=1 // pred_check_branch
      %17 = sbr.rel (0) target = $region17
    $region16: #{transformer_forward.15} parent=1 // pred_region
      _
    $region17: #{transformer_forward.15} parent=1 // pred_fallthru
      _
    %v19 = vld [vmem:[%s0] sm:$0xff]
    %v20 = vld [vmem:[%s0 + $0x8] sm:$0xff]
    %v21 = vpack.c.bf16 %v20, %v19
    %v22 = vld [vmem:[%s1] sm:$0xf]
    %v23 = vld [vmem:[%s1 + $0x4] sm:$0xf]
    %v24 = vld [vmem:[%s1 + $0x8] sm:$0xf]
    %v25 = vld [vmem:[%s1 + $0xc] sm:$0xf]
    %v26 = vld [vmem:[%s1 + $0x10] sm:$0xf]
    %v27 = vld [vmem:[%s1 + $0x14] sm:$0xf]
    %v28 = vld [vmem:[%s1 + $0x18] sm:$0xf]
    %v29 = vld [vmem:[%s1 + $0x1c] sm:$0xf]
    %v30 = vld [vmem:[%s2] sm:$0x1]
    %v32 = vlaneseq
    %v33 = vshrl.u32 %v32, 7
    %v34 = vsub.s32 0, %v33
    %v35 = vrot.slane %v30, %v34
    %v45 = vunpack.c.l.b16 %v22
    %v46 = vunpack.c.l.b16 %v23
    %v47 = vunpack.c.l.b16 %v24
    %v48 = vunpack.c.l.b16 %v25
    %v49 = vunpack.c.l.b16 %v26
    %v50 = vunpack.c.l.b16 %v27
    %v51 = vunpack.c.l.b16 %v28
    %v52 = vunpack.c.l.b16 %v29
    %v53 = vpack.c.b16 %v46, %v45
    %v54 = vpack.c.b16 %v48, %v47
    %v55 = vpack.c.b16 %v50, %v49
    %v56 = vpack.c.b16 %v52, %v51
    %vm61 = vcmask 523264
    %v63 = vsel %vm61, %v21, 0
    %65 = vmatprep.subr.bf16.mxu0 0
    %66 = vmatpush1.bf16.msra.mxu0 0
    %67 = vmatprep.subr.bf16.mxu0 0
    %68 = vmatpush1.bf16.msra.mxu0 0
    %69 = vmatprep.subr.bf16.mxu0 0
    %70 = vmatpush1.bf16.msra.mxu0 0
    %71 = vmatprep.subr.bf16.mxu0 0
    %72 = vmatpush1.bf16.msra.mxu0 0
    %73 = vmatprep.subr.bf16.mxu0 0
    %74 = vmatpush1.bf16.msra.mxu0 %v56
    %75 = vmatprep.subr.bf16.mxu0 0
    %76 = vmatpush1.bf16.msra.mxu0 %v55
    %77 = vmatprep.subr.bf16.mxu0 0
    %78 = vmatpush1.bf16.msra.mxu0 %v54
    %79 = vmatprep.subr.bf16.mxu0 0
    %80 = vmatpush1.bf16.msra.mxu0 %v53
    %81 = vmatprep.subr.bf16.mxu0 0
    %82 = vmatpush2.bf16.msra.mxu0 0
    %83 = vmatprep.subr.bf16.mxu0 0
    %84 = vmatpush2.bf16.msra.mxu0 0
    %85 = vmatprep.subr.bf16.mxu0 0
    %86 = vmatpush2.bf16.msra.mxu0 0
    %87 = vmatprep.subr.bf16.mxu0 0
    %88 = vmatpush2.bf16.msra.mxu0 0
    %89 = vmatprep.subr.bf16.mxu0 0
    %90 = vmatpush2.bf16.msra.mxu0 0
    %91 = vmatprep.subr.bf16.mxu0 0
    %92 = vmatpush2.bf16.msra.mxu0 0
    %93 = vmatprep.subr.bf16.mxu0 0
    %94 = vmatpush2.bf16.msra.mxu0 0
    %95 = vmatprep.subr.bf16.mxu0 0
    %96 = vmatpush2.bf16.msra.mxu0 0
    %97 = vmatprep.mubr.bf16.mxu0 0
    %98 = vmatmul.mubr.bf16.gmra.mxu0 %v63
    %v99 = vpop.f32.mrf.mxu0
    %v100 = vadd.f32 %v35, %v99
    %v101 = vpop.f32.mrf.mxu0
    %v102 = vpop.f32.mrf.mxu0
    %v103 = vadd.f32 %v35, %v102
    %v104 = vpop.f32.mrf.mxu0
    %105 = vdwg.mxu0
    %v106 = vld [vmem:[%s3] sm:$0xff]
    %v107 = vld [vmem:[%s3 + $0x8] sm:$0xff]
    %v108 = vadd.f32 %v100, %v106
    %v109 = vadd.f32 %v103, %v107
    %110 = vst.msk [vmem:[#allocation2] sm:$0xff] %vm61, %v108
    %111 = vst.msk [vmem:[#allocation2 + $0x8] sm:$0xff] %vm61, %v109
    // Predicated region
    $region18: #{transformer_forward.15} parent=1 // pred_check
      _
    $region19: #{transformer_forward.15} parent=1 // pred_check_branch
      %113 = sbr.rel (0) target = $region21
    $region20: #{transformer_forward.15} parent=1 // pred_region
      %s115 = ssub.s32 256, 256
      %116 = vsyncadd [#allocation3], %s115
      %s117 = sshll.u32 [#allocation2], 4
      %s118 = int_to_ptr.vmem [resolvable:$true] %s117
      %123 = dma.vmem_to_hbm [thread:$0]  %s118, 256, %s4, [#allocation3], 128, 128, 8
    $region21: #{transformer_forward.15} parent=1 // pred_fallthru
      _
    // Predicated region
    $region22: #{transformer_forward.15} parent=1 // pred_check
      _
    $region23: #{transformer_forward.15} parent=1 // pred_check_branch
      %125 = sbr.rel (0) target = $region25
    $region24: #{transformer_forward.15} parent=1 // pred_region
      %126 = dma.done [#allocation3], 256
    $region25: #{transformer_forward.15} parent=1 // pred_fallthru
      _
    %127 = vsyncpa [#allocation3], 1

</llo_original>
